<compile_context>
chip_gen: v7x
topology: tpu7x:2x2x1
jax: 0.10.0
libtpu: 0.0.40
codegen_flags: <defaults>
</compile_context>

<pallas_src>
import functools
import math

import jax
import jax.numpy as jnp
import numpy as np
from jax.experimental import pallas as pl
from jax.experimental.pallas import tpu as pltpu


_VMEM_LIMIT_BYTES = 64 * 1024 * 1024            # raise above 16/32 MiB scoped defaults
_VMEM_BUDGET_BYTES = int(0.70 * 64 * 1024 * 1024)  # stay inside v7x 64 MiB physical VMEM


# ----------------------------------------------------------------------------
# Kernel 1: per-batch Q/K/V projection, head split, K pre-transpose.
# ----------------------------------------------------------------------------
def qkv_project_kernel(q_ref, kT_ref, v_ref,
                       wqT_ref, bq_ref, wk_ref, bk_ref, wvT_ref, bv_ref,
                       qh_ref, khT_ref, vh_ref,
                       *, n_heads: int, head_dim: int, mxu_dtype):
    f32 = jnp.float32
    inv_scale = f32(1.0 / math.sqrt(head_dim))

    q = q_ref[0].astype(mxu_dtype)      # (S, H)
    kT = kT_ref[0].astype(mxu_dtype)    # (H, S)  (transposed once on the host)
    v = v_ref[0].astype(mxu_dtype)      # (S, H)

    # Q = q @ Wq^T + bq, scale folded in once here (not per energy tile).
    Q = (jnp.dot(q, wqT_ref[...].astype(mxu_dtype), preferred_element_type=f32)
         + bq_ref[...]) * inv_scale                                   # (S, H)
    # K^T = Wk @ k^T + bk  -> already transposed, no in-kernel XLU transpose.
    KT = (jnp.dot(wk_ref[...].astype(mxu_dtype), kT, preferred_element_type=f32)
          + bk_ref[...])                                              # (H, S)
    V = (jnp.dot(v, wvT_ref[...].astype(mxu_dtype), preferred_element_type=f32)
         + bv_ref[...])                                               # (S, H)

    d = head_dim
    for h in range(n_heads):
        qh_ref[0, h] = Q[:, h * d:(h + 1) * d].astype(qh_ref.dtype)   # (S, d)
        khT_ref[0, h] = KT[h * d:(h + 1) * d, :].astype(khT_ref.dtype)  # (d, S) sublane slice
        vh_ref[0, h] = V[:, h * d:(h + 1) * d].astype(vh_ref.dtype)   # (S, d)


# ----------------------------------------------------------------------------
# Kernel 2: per-query-tile attention + output projection.
# ----------------------------------------------------------------------------
def _attention_body(qh_ref, khT_ref, vh_ref, woT_ref, bo_ref, x_ref, attn_ref,
                    *, n_heads: int, approx_recip: bool, mxu_dtype):
    f32 = jnp.float32
    ctx_heads = []
    # Static per-head loop: live intermediates stay O(TQ*S), not O(nh*TQ*S).
    for h in range(n_heads):
        qh = qh_ref[0, h]                                   # (TQ, d), mxu dtype
        kT = khT_ref[0, h]                                  # (d, S),  mxu dtype
        energy = jnp.dot(qh, kT, preferred_element_type=f32)  # (TQ, S)
        m = jnp.max(energy, axis=-1, keepdims=True)
        e = jnp.exp(energy - m)
        denom = jnp.sum(e, axis=-1, keepdims=True)
        p = e * pl.reciprocal(denom, approx=approx_recip)   # softmax rows
        if attn_ref is not None:
            attn_ref[0, h] = p.astype(attn_ref.dtype)       # lane-dense (TQ, S) store
        ctx_heads.append(jnp.dot(p.astype(mxu_dtype), vh_ref[0, h],
                                 preferred_element_type=f32))          # (TQ, d)

    # One lane-concat, then ONE full-depth (TQ,H)@(H,H) output projection.
    ctx = jnp.concatenate(ctx_heads, axis=-1)                           # (TQ, H)
    x = jnp.dot(ctx.astype(mxu_dtype), woT_ref[...].astype(mxu_dtype),
                preferred_element_type=f32) + bo_ref[...]
    x_ref[0] = x.astype(x_ref.dtype)


def mha_attn_kernel(qh_ref, khT_ref, vh_ref, woT_ref, bo_ref, x_ref, attn_ref, **kw):
    _attention_body(qh_ref, khT_ref, vh_ref, woT_ref, bo_ref, x_ref, attn_ref, **kw)


def mha_x_only_kernel(qh_ref, khT_ref, vh_ref, woT_ref, bo_ref, x_ref, **kw):
    _attention_body(qh_ref, khT_ref, vh_ref, woT_ref, bo_ref, x_ref, None, **kw)


# ----------------------------------------------------------------------------
# VMEM-budget-aware query-tile picker.
# ----------------------------------------------------------------------------
def _pick_query_tile(S, H, n_heads, head_dim, *, proj_itemsize, attn_itemsize,
                     budget_bytes=_VMEM_BUDGET_BYTES):
    nh, d = n_heads, head_dim

    def vmem_bytes(tq):
        inp = 2 * nh * tq * d * proj_itemsize                 # Qh tile (double-buffered)
        inp += 2 * (nh * d * S + nh * S * d) * proj_itemsize  # KhT + Vh (double-buffered)
        consts = (H * H * proj_itemsize + H * 4)              # WoT + bo (single-buffered)
        out = 2 * tq * H * 4 + 2 * nh * tq * S * attn_itemsize  # x + attn blocks
        live = (3 * tq * S + tq * H + tq * d) * 4             # per-head softmax + ctx
        return inp + consts + out + live

    # Sublane-aligned divisors of S, descending; S itself is always layout-legal.
    cands = sorted({t for t in range(8, S + 1, 8) if S % t == 0} | {S}, reverse=True)
    for t in cands:
        if vmem_bytes(t) <= budget_bytes:
            return t
    return cands[-1]


# ----------------------------------------------------------------------------
# Host wrapper.
# ----------------------------------------------------------------------------
def _mha_forward(query, key, value, params, *, n_heads, approx_recip, mxu_dtype,
                 attn_dtype, return_attention, single_buffer_consts):
    B, S, H = query.shape
    assert H % n_heads == 0
    head_dim = H // n_heads
    wq, bq, wk, bk, wv, bv, wo, bo = params

    # Pre-transpose / pre-cast weights once on the host (PyTorch Linear stores (out, in)).
    wqT = wq.T.astype(mxu_dtype)
    wvT = wv.T.astype(mxu_dtype)
    woT = wo.T.astype(mxu_dtype)
    wk_c = wk.astype(mxu_dtype)          # kept un-transposed: used as Wk @ k^T
    bk_col = bk.reshape(H, 1)            # column bias for the transposed K path
    kT = key.transpose(0, 2, 1)          # (B, H, S), host-side XLA transpose

    proj_dtype = mxu_dtype

    def const_spec(shape):
        idx = lambda *args: (0,) * len(shape)
        if single_buffer_consts:
            # Same block every step -> single-buffer to halve its VMEM footprint.
            return pl.BlockSpec(shape, idx, pipeline_mode=pl.Buffered(1))
        return pl.BlockSpec(shape, idx)

    # ---------------- Kernel 1: projections (grid over batch only) ----------------
    proj_kernel = functools.partial(qkv_project_kernel, n_heads=n_heads,
                                    head_dim=head_dim, mxu_dtype=mxu_dtype)
    qh, khT, vh = pl.pallas_call(
        proj_kernel,
        out_shape=(
            jax.ShapeDtypeStruct((B, n_heads, S, head_dim), proj_dtype),
            jax.ShapeDtypeStruct((B, n_heads, head_dim, S), proj_dtype),
            jax.ShapeDtypeStruct((B, n_heads, S, head_dim), proj_dtype),
        ),
        grid_spec=pltpu.PrefetchScalarGridSpec(
            num_scalar_prefetch=0,
            grid=(B,),
            in_specs=[
                pl.BlockSpec((1, S, H), lambda b: (b, 0, 0)),
                pl.BlockSpec((1, H, S), lambda b: (b, 0, 0)),
                pl.BlockSpec((1, S, H), lambda b: (b, 0, 0)),
                const_spec((H, H)), const_spec((1, H)),   # fc_q
                const_spec((H, H)), const_spec((H, 1)),   # fc_k (un-transposed, column bias)
                const_spec((H, H)), const_spec((1, H)),   # fc_v
            ],
            out_specs=[
                pl.BlockSpec((1, n_heads, S, head_dim), lambda b: (b, 0, 0, 0)),
                pl.BlockSpec((1, n_heads, head_dim, S), lambda b: (b, 0, 0, 0)),
                pl.BlockSpec((1, n_heads, S, head_dim), lambda b: (b, 0, 0, 0)),
            ],
        ),
        compiler_params=pltpu.CompilerParams(
            dimension_semantics=("parallel",),
            vmem_limit_bytes=_VMEM_LIMIT_BYTES,
        ),
    )(query, kT, value, wqT, bq, wk_c, bk_col, wvT, bv)

    # ---------------- Kernel 2: attention + output projection ----------------
    TQ = _pick_query_tile(S, H, n_heads, head_dim,
                          proj_itemsize=np.dtype(proj_dtype).itemsize,
                          attn_itemsize=np.dtype(attn_dtype).itemsize)
    grid = (B, S // TQ)

    in_specs = [
        pl.BlockSpec((1, n_heads, TQ, head_dim), lambda b, i: (b, 0, i, 0)),
        pl.BlockSpec((1, n_heads, head_dim, S), lambda b, i: (b, 0, 0, 0)),
        pl.BlockSpec((1, n_heads, S, head_dim), lambda b, i: (b, 0, 0, 0)),
        const_spec((H, H)), const_spec((1, H)),   # fc_o
    ]
    x_spec = pl.BlockSpec((1, TQ, H), lambda b, i: (b, i, 0))
    common = dict(n_heads=n_heads, approx_recip=approx_recip, mxu_dtype=mxu_dtype)

    if return_attention:
        kernel = functools.partial(mha_attn_kernel, **common)
        out_shape = (jax.ShapeDtypeStruct((B, S, H), jnp.float32),
                     jax.ShapeDtypeStruct((B, n_heads, S, S), attn_dtype))
        out_specs = [x_spec,
                     pl.BlockSpec((1, n_heads, TQ, S), lambda b, i: (b, 0, i, 0))]
    else:
        kernel = functools.partial(mha_x_only_kernel, **common)
        out_shape = jax.ShapeDtypeStruct((B, S, H), jnp.float32)
        out_specs = x_spec

    return pl.pallas_call(
        kernel,
        out_shape=out_shape,
        grid_spec=pltpu.PrefetchScalarGridSpec(
            num_scalar_prefetch=0,
            grid=grid,
            in_specs=in_specs,
            out_specs=out_specs,
        ),
        compiler_params=pltpu.CompilerParams(
            dimension_semantics=("parallel", "parallel"),
            vmem_limit_bytes=_VMEM_LIMIT_BYTES,
        ),
    )(qh, khT, vh, woT, bo)


def multi_head_attention(query, key, value, params, *, n_heads,
                         approx_recip=False, mxu_dtype=jnp.float32,
                         attn_dtype=jnp.float32, return_attention=True):
    kwargs = dict(n_heads=n_heads, approx_recip=approx_recip, mxu_dtype=mxu_dtype,
                  attn_dtype=attn_dtype, return_attention=return_attention)
    try:
        return _mha_forward(query, key, value, params,
                            single_buffer_consts=True, **kwargs)
    except Exception:
        # Some jax/libtpu builds reject pl.Buffered(1) single-buffering of the
        # constant operands; fall back to default double buffering.
        return _mha_forward(query, key, value, params,
                            single_buffer_consts=False, **kwargs)


# ----------------------------------------------------------------------------
# Pure-JAX reference mirroring the PyTorch forward exactly.
# ----------------------------------------------------------------------------
def reference_mha(query, key, value, params, *, n_heads):
    B, S, H = query.shape
    d = H // n_heads
    wq, bq, wk, bk, wv, bv, wo, bo = params
    with jax.default_matmul_precision("highest"):
        Q = query @ wq.T + bq[0]
        K = key @ wk.T + bk[0]
        V = value @ wv.T + bv[0]
        Q = Q.reshape(B, S, n_heads, d).transpose(0, 2, 1, 3)
        K = K.reshape(B, S, n_heads, d).transpose(0, 2, 1, 3)
        V = V.reshape(B, S, n_heads, d).transpose(0, 2, 1, 3)
        energy = jnp.einsum("bhqd,bhkd->bhqk", Q, K) / jnp.sqrt(jnp.float32(d))
        attn = jax.nn.softmax(energy, axis=-1)
        x = jnp.einsum("bhqk,bhkd->bhqd", attn, V)
        x = x.transpose(0, 2, 1, 3).reshape(B, S, H)
        x = x @ wo.T + bo[0]
    return x, attn


if __name__ == "__main__":
    B, S, H = 2, 8, 32
    n_heads = 4

    root = jax.random.PRNGKey(0)
    keys = jax.random.split(root, 12)

    query = jax.random.normal(keys[0], (B, S, H), dtype=jnp.float32)
    key_in = jax.random.normal(keys[1], (B, S, H), dtype=jnp.float32)
    value = jax.random.normal(keys[2], (B, S, H), dtype=jnp.float32)

    init = 1.0 / np.sqrt(H)
    wq = jax.random.uniform(keys[3], (H, H), minval=-init, maxval=init, dtype=jnp.float32)
    bq = jax.random.uniform(keys[4], (1, H), minval=-init, maxval=init, dtype=jnp.float32)
    wk = jax.random.uniform(keys[5], (H, H), minval=-init, maxval=init, dtype=jnp.float32)
    bk = jax.random.uniform(keys[6], (1, H), minval=-init, maxval=init, dtype=jnp.float32)
    wv = jax.random.uniform(keys[7], (H, H), minval=-init, maxval=init, dtype=jnp.float32)
    bv = jax.random.uniform(keys[8], (1, H), minval=-init, maxval=init, dtype=jnp.float32)
    wo = jax.random.uniform(keys[9], (H, H), minval=-init, maxval=init, dtype=jnp.float32)
    bo = jax.random.uniform(keys[10], (1, H), minval=-init, maxval=init, dtype=jnp.float32)

    params = (wq, bq, wk, bk, wv, bv, wo, bo)

    x_expected, attn_expected = reference_mha(query, key_in, value, params, n_heads=n_heads)

    # 1) Exact path: f32 MXU operands + exact reciprocal -> matches PyTorch softmax.
    x_exact, attn_exact = multi_head_attention(
        query, key_in, value, params, n_heads=n_heads,
        approx_recip=False, mxu_dtype=jnp.float32)
    jax.block_until_ready((x_exact, attn_exact))
    np.testing.assert_allclose(np.asarray(x_exact), np.asarray(x_expected),
                               rtol=1e-4, atol=1e-4)
    np.testing.assert_allclose(np.asarray(attn_exact), np.asarray(attn_expected),
                               rtol=1e-4, atol=1e-4)

    # 2) Fast path (v6e / v7x): bf16 MXU operands + EUP approximate reciprocal.
    x_fast, attn_fast = multi_head_attention(
        query, key_in, value, params, n_heads=n_heads,
        approx_recip=True, mxu_dtype=jnp.bfloat16)
    jax.block_until_ready((x_fast, attn_fast))
    np.testing.assert_allclose(np.asarray(x_fast), np.asarray(x_expected),
                               rtol=6e-2, atol=6e-2)
    np.testing.assert_allclose(np.asarray(attn_fast), np.asarray(attn_expected),
                               rtol=6e-2, atol=6e-2)

    # 3) x-only path: skips the B*nh*S^2 attention write (the HBM roofline).
    x_only = multi_head_attention(
        query, key_in, value, params, n_heads=n_heads,
        approx_recip=False, mxu_dtype=jnp.float32, return_attention=False)
    jax.block_until_ready(x_only)
    np.testing.assert_allclose(np.asarray(x_only), np.asarray(x_expected),
                               rtol=1e-4, atol=1e-4)

    print("KERNEL_OK")
</pallas_src>

<mosaic_0001>
module attributes {stable_mosaic.version = 11 : i64} {
  func.func @qkv_project_kernel(%arg0: i32, %arg1: memref<1x8x32xf32, #tpu.memory_space<vmem>>, %arg2: memref<1x32x8xf32, #tpu.memory_space<vmem>>, %arg3: memref<1x8x32xf32, #tpu.memory_space<vmem>>, %arg4: memref<32x32xf32, #tpu.memory_space<vmem>>, %arg5: memref<1x32xf32, #tpu.memory_space<vmem>>, %arg6: memref<32x32xf32, #tpu.memory_space<vmem>>, %arg7: memref<32x1xf32, #tpu.memory_space<vmem>>, %arg8: memref<32x32xf32, #tpu.memory_space<vmem>>, %arg9: memref<1x32xf32, #tpu.memory_space<vmem>>, %arg10: memref<1x4x8x8xf32, #tpu.memory_space<vmem>>, %arg11: memref<1x4x8x8xf32, #tpu.memory_space<vmem>>, %arg12: memref<1x4x8x8xf32, #tpu.memory_space<vmem>>) attributes {dimension_semantics = [#tpu.dimension_semantics<parallel>], iteration_bounds = array<i64: 2>, scalar_prefetch = 0 : i64, scratch_operands = 0 : i64, tpu.core_type = #tpu.core_type<tc>, window_params = [{transform_indices = @transform_0, window_bounds = array<i64: 1, 8, 32>}, {transform_indices = @transform_1, window_bounds = array<i64: 1, 32, 8>}, {transform_indices = @transform_2, window_bounds = array<i64: 1, 8, 32>}, {pipeline_mode = #tpu.pipeline_mode<synchronous>, transform_indices = @transform_3, window_bounds = array<i64: 32, 32>}, {pipeline_mode = #tpu.pipeline_mode<synchronous>, transform_indices = @transform_4, window_bounds = array<i64: 1, 32>}, {pipeline_mode = #tpu.pipeline_mode<synchronous>, transform_indices = @transform_5, window_bounds = array<i64: 32, 32>}, {pipeline_mode = #tpu.pipeline_mode<synchronous>, transform_indices = @transform_6, window_bounds = array<i64: 32, 1>}, {pipeline_mode = #tpu.pipeline_mode<synchronous>, transform_indices = @transform_7, window_bounds = array<i64: 32, 32>}, {pipeline_mode = #tpu.pipeline_mode<synchronous>, transform_indices = @transform_8, window_bounds = array<i64: 1, 32>}, {transform_indices = @transform_9, window_bounds = array<i64: 1, 4, 8, 8>}, {transform_indices = @transform_10, window_bounds = array<i64: 1, 4, 8, 8>}, {transform_indices = @transform_11, window_bounds = array<i64: 1, 4, 8, 8>}]} {
    %c0 = arith.constant 0 : index
    %c0_0 = arith.constant 0 : index
    %c0_1 = arith.constant 0 : index
    %0 = vector.load %arg1[%c0, %c0_0, %c0_1] : memref<1x8x32xf32, #tpu.memory_space<vmem>>, vector<1x8x32xf32>
    %1 = vector.shape_cast %0 : vector<1x8x32xf32> to vector<8x32xf32>
    %c0_2 = arith.constant 0 : index
    %c0_3 = arith.constant 0 : index
    %c0_4 = arith.constant 0 : index
    %2 = vector.load %arg2[%c0_2, %c0_3, %c0_4] : memref<1x32x8xf32, #tpu.memory_space<vmem>>, vector<1x32x8xf32>
    %3 = vector.shape_cast %2 : vector<1x32x8xf32> to vector<32x8xf32>
    %c0_5 = arith.constant 0 : index
    %c0_6 = arith.constant 0 : index
    %c0_7 = arith.constant 0 : index
    %4 = vector.load %arg3[%c0_5, %c0_6, %c0_7] : memref<1x8x32xf32, #tpu.memory_space<vmem>>, vector<1x8x32xf32>
    %5 = vector.shape_cast %4 : vector<1x8x32xf32> to vector<8x32xf32>
    %c0_8 = arith.constant 0 : index
    %c0_9 = arith.constant 0 : index
    %6 = vector.load %arg4[%c0_8, %c0_9] : memref<32x32xf32, #tpu.memory_space<vmem>>, vector<32x32xf32>
    %cst = arith.constant dense<0.000000e+00> : vector<8x32xf32>
    %7 = tpu.matmul %1, %6, %cst {dimension_numbers = #tpu.dot_dimension_numbers<[1], [0], [0], [1], [0, 0, 1, 1], [], []>} : vector<8x32xf32>, vector<32x32xf32>, vector<8x32xf32> -> vector<8x32xf32>
    %c0_10 = arith.constant 0 : index
    %c0_11 = arith.constant 0 : index
    %8 = vector.load %arg5[%c0_10, %c0_11] : memref<1x32xf32, #tpu.memory_space<vmem>>, vector<1x32xf32>
    %9 = vector.broadcast %8 : vector<1x32xf32> to vector<8x32xf32>
    %10 = arith.addf %7, %9 : vector<8x32xf32>
    %cst_12 = arith.constant 0.353553385 : f32
    %11 = vector.broadcast %cst_12 : f32 to vector<8x32xf32>
    %12 = arith.mulf %10, %11 : vector<8x32xf32>
    %c0_13 = arith.constant 0 : index
    %c0_14 = arith.constant 0 : index
    %13 = vector.load %arg6[%c0_13, %c0_14] : memref<32x32xf32, #tpu.memory_space<vmem>>, vector<32x32xf32>
    %cst_15 = arith.constant dense<0.000000e+00> : vector<32x8xf32>
    %14 = tpu.matmul %13, %3, %cst_15 {dimension_numbers = #tpu.dot_dimension_numbers<[1], [0], [0], [1], [0, 0, 1, 1], [], []>} : vector<32x32xf32>, vector<32x8xf32>, vector<32x8xf32> -> vector<32x8xf32>
    %c0_16 = arith.constant 0 : index
    %c0_17 = arith.constant 0 : index
    %15 = vector.load %arg7[%c0_16, %c0_17] : memref<32x1xf32, #tpu.memory_space<vmem>>, vector<32x1xf32>
    %16 = vector.broadcast %15 : vector<32x1xf32> to vector<32x8xf32>
    %17 = arith.addf %14, %16 : vector<32x8xf32>
    %c0_18 = arith.constant 0 : index
    %c0_19 = arith.constant 0 : index
    %18 = vector.load %arg8[%c0_18, %c0_19] : memref<32x32xf32, #tpu.memory_space<vmem>>, vector<32x32xf32>
    %cst_20 = arith.constant dense<0.000000e+00> : vector<8x32xf32>
    %19 = tpu.matmul %5, %18, %cst_20 {dimension_numbers = #tpu.dot_dimension_numbers<[1], [0], [0], [1], [0, 0, 1, 1], [], []>} : vector<8x32xf32>, vector<32x32xf32>, vector<8x32xf32> -> vector<8x32xf32>
    %c0_21 = arith.constant 0 : index
    %c0_22 = arith.constant 0 : index
    %20 = vector.load %arg9[%c0_21, %c0_22] : memref<1x32xf32, #tpu.memory_space<vmem>>, vector<1x32xf32>
    %21 = vector.broadcast %20 : vector<1x32xf32> to vector<8x32xf32>
    %22 = arith.addf %19, %21 : vector<8x32xf32>
    %23 = vector.extract_strided_slice %12 {offsets = [0, 0], sizes = [8, 8], strides = [1, 1]} : vector<8x32xf32> to vector<8x8xf32>
    %c0_23 = arith.constant 0 : index
    %c0_24 = arith.constant 0 : index
    %c0_25 = arith.constant 0 : index
    %c0_26 = arith.constant 0 : index
    %24 = vector.load %arg10[%c0_23, %c0_24, %c0_25, %c0_26] : memref<1x4x8x8xf32, #tpu.memory_space<vmem>>, vector<1x1x8x8xf32>
    %25 = vector.shape_cast %24 : vector<1x1x8x8xf32> to vector<8x8xf32>
    %26 = vector.shape_cast %23 : vector<8x8xf32> to vector<1x1x8x8xf32>
    tpu.vector_store %arg10[%c0_23, %c0_24, %c0_25, %c0_26], %26 {strides = array<i32>} : memref<1x4x8x8xf32, #tpu.memory_space<vmem>>, vector<1x1x8x8xf32>,
    %27 = vector.extract_strided_slice %17 {offsets = [0, 0], sizes = [8, 8], strides = [1, 1]} : vector<32x8xf32> to vector<8x8xf32>
    %c0_27 = arith.constant 0 : index
    %c0_28 = arith.constant 0 : index
    %c0_29 = arith.constant 0 : index
    %c0_30 = arith.constant 0 : index
    %28 = vector.load %arg11[%c0_27, %c0_28, %c0_29, %c0_30] : memref<1x4x8x8xf32, #tpu.memory_space<vmem>>, vector<1x1x8x8xf32>
    %29 = vector.shape_cast %28 : vector<1x1x8x8xf32> to vector<8x8xf32>
    %30 = vector.shape_cast %27 : vector<8x8xf32> to vector<1x1x8x8xf32>
    tpu.vector_store %arg11[%c0_27, %c0_28, %c0_29, %c0_30], %30 {strides = array<i32>} : memref<1x4x8x8xf32, #tpu.memory_space<vmem>>, vector<1x1x8x8xf32>,
    %31 = vector.extract_strided_slice %22 {offsets = [0, 0], sizes = [8, 8], strides = [1, 1]} : vector<8x32xf32> to vector<8x8xf32>
    %c0_31 = arith.constant 0 : index
    %c0_32 = arith.constant 0 : index
    %c0_33 = arith.constant 0 : index
    %c0_34 = arith.constant 0 : index
    %32 = vector.load %arg12[%c0_31, %c0_32, %c0_33, %c0_34] : memref<1x4x8x8xf32, #tpu.memory_space<vmem>>, vector<1x1x8x8xf32>
    %33 = vector.shape_cast %32 : vector<1x1x8x8xf32> to vector<8x8xf32>
    %34 = vector.shape_cast %31 : vector<8x8xf32> to vector<1x1x8x8xf32>
    tpu.vector_store %arg12[%c0_31, %c0_32, %c0_33, %c0_34], %34 {strides = array<i32>} : memref<1x4x8x8xf32, #tpu.memory_space<vmem>>, vector<1x1x8x8xf32>,
    %35 = vector.extract_strided_slice %12 {offsets = [0, 8], sizes = [8, 8], strides = [1, 1]} : vector<8x32xf32> to vector<8x8xf32>
    %c0_35 = arith.constant 0 : index
    %c1 = arith.constant 1 : index
    %c0_36 = arith.constant 0 : index
    %c0_37 = arith.constant 0 : index
    %36 = vector.load %arg10[%c0_35, %c1, %c0_36, %c0_37] : memref<1x4x8x8xf32, #tpu.memory_space<vmem>>, vector<1x1x8x8xf32>
    %37 = vector.shape_cast %36 : vector<1x1x8x8xf32> to vector<8x8xf32>
    %38 = vector.shape_cast %35 : vector<8x8xf32> to vector<1x1x8x8xf32>
    tpu.vector_store %arg10[%c0_35, %c1, %c0_36, %c0_37], %38 {strides = array<i32>} : memref<1x4x8x8xf32, #tpu.memory_space<vmem>>, vector<1x1x8x8xf32>,
    %39 = vector.extract_strided_slice %17 {offsets = [8, 0], sizes = [8, 8], strides = [1, 1]} : vector<32x8xf32> to vector<8x8xf32>
    %c0_38 = arith.constant 0 : index
    %c1_39 = arith.constant 1 : index
    %c0_40 = arith.constant 0 : index
    %c0_41 = arith.constant 0 : index
    %40 = vector.load %arg11[%c0_38, %c1_39, %c0_40, %c0_41] : memref<1x4x8x8xf32, #tpu.memory_space<vmem>>, vector<1x1x8x8xf32>
    %41 = vector.shape_cast %40 : vector<1x1x8x8xf32> to vector<8x8xf32>
    %42 = vector.shape_cast %39 : vector<8x8xf32> to vector<1x1x8x8xf32>
    tpu.vector_store %arg11[%c0_38, %c1_39, %c0_40, %c0_41], %42 {strides = array<i32>} : memref<1x4x8x8xf32, #tpu.memory_space<vmem>>, vector<1x1x8x8xf32>,
    %43 = vector.extract_strided_slice %22 {offsets = [0, 8], sizes = [8, 8], strides = [1, 1]} : vector<8x32xf32> to vector<8x8xf32>
    %c0_42 = arith.constant 0 : index
    %c1_43 = arith.constant 1 : index
    %c0_44 = arith.constant 0 : index
    %c0_45 = arith.constant 0 : index
    %44 = vector.load %arg12[%c0_42, %c1_43, %c0_44, %c0_45] : memref<1x4x8x8xf32, #tpu.memory_space<vmem>>, vector<1x1x8x8xf32>
    %45 = vector.shape_cast %44 : vector<1x1x8x8xf32> to vector<8x8xf32>
    %46 = vector.shape_cast %43 : vector<8x8xf32> to vector<1x1x8x8xf32>
    tpu.vector_store %arg12[%c0_42, %c1_43, %c0_44, %c0_45], %46 {strides = array<i32>} : memref<1x4x8x8xf32, #tpu.memory_space<vmem>>, vector<1x1x8x8xf32>,
    %47 = vector.extract_strided_slice %12 {offsets = [0, 16], sizes = [8, 8], strides = [1, 1]} : vector<8x32xf32> to vector<8x8xf32>
    %c0_46 = arith.constant 0 : index
    %c2 = arith.constant 2 : index
    %c0_47 = arith.constant 0 : index
    %c0_48 = arith.constant 0 : index
    %48 = vector.load %arg10[%c0_46, %c2, %c0_47, %c0_48] : memref<1x4x8x8xf32, #tpu.memory_space<vmem>>, vector<1x1x8x8xf32>
    %49 = vector.shape_cast %48 : vector<1x1x8x8xf32> to vector<8x8xf32>
    %50 = vector.shape_cast %47 : vector<8x8xf32> to vector<1x1x8x8xf32>
    tpu.vector_store %arg10[%c0_46, %c2, %c0_47, %c0_48], %50 {strides = array<i32>} : memref<1x4x8x8xf32, #tpu.memory_space<vmem>>, vector<1x1x8x8xf32>,
    %51 = vector.extract_strided_slice %17 {offsets = [16, 0], sizes = [8, 8], strides = [1, 1]} : vector<32x8xf32> to vector<8x8xf32>
    %c0_49 = arith.constant 0 : index
    %c2_50 = arith.constant 2 : index
    %c0_51 = arith.constant 0 : index
    %c0_52 = arith.constant 0 : index
    %52 = vector.load %arg11[%c0_49, %c2_50, %c0_51, %c0_52] : memref<1x4x8x8xf32, #tpu.memory_space<vmem>>, vector<1x1x8x8xf32>
    %53 = vector.shape_cast %52 : vector<1x1x8x8xf32> to vector<8x8xf32>
    %54 = vector.shape_cast %51 : vector<8x8xf32> to vector<1x1x8x8xf32>
    tpu.vector_store %arg11[%c0_49, %c2_50, %c0_51, %c0_52], %54 {strides = array<i32>} : memref<1x4x8x8xf32, #tpu.memory_space<vmem>>, vector<1x1x8x8xf32>,
    %55 = vector.extract_strided_slice %22 {offsets = [0, 16], sizes = [8, 8], strides = [1, 1]} : vector<8x32xf32> to vector<8x8xf32>
    %c0_53 = arith.constant 0 : index
    %c2_54 = arith.constant 2 : index
    %c0_55 = arith.constant 0 : index
    %c0_56 = arith.constant 0 : index
    %56 = vector.load %arg12[%c0_53, %c2_54, %c0_55, %c0_56] : memref<1x4x8x8xf32, #tpu.memory_space<vmem>>, vector<1x1x8x8xf32>
    %57 = vector.shape_cast %56 : vector<1x1x8x8xf32> to vector<8x8xf32>
    %58 = vector.shape_cast %55 : vector<8x8xf32> to vector<1x1x8x8xf32>
    tpu.vector_store %arg12[%c0_53, %c2_54, %c0_55, %c0_56], %58 {strides = array<i32>} : memref<1x4x8x8xf32, #tpu.memory_space<vmem>>, vector<1x1x8x8xf32>,
    %59 = vector.extract_strided_slice %12 {offsets = [0, 24], sizes = [8, 8], strides = [1, 1]} : vector<8x32xf32> to vector<8x8xf32>
    %c0_57 = arith.constant 0 : index
    %c3 = arith.constant 3 : index
    %c0_58 = arith.constant 0 : index
    %c0_59 = arith.constant 0 : index
    %60 = vector.load %arg10[%c0_57, %c3, %c0_58, %c0_59] : memref<1x4x8x8xf32, #tpu.memory_space<vmem>>, vector<1x1x8x8xf32>
    %61 = vector.shape_cast %60 : vector<1x1x8x8xf32> to vector<8x8xf32>
    %62 = vector.shape_cast %59 : vector<8x8xf32> to vector<1x1x8x8xf32>
    tpu.vector_store %arg10[%c0_57, %c3, %c0_58, %c0_59], %62 {strides = array<i32>} : memref<1x4x8x8xf32, #tpu.memory_space<vmem>>, vector<1x1x8x8xf32>,
    %63 = vector.extract_strided_slice %17 {offsets = [24, 0], sizes = [8, 8], strides = [1, 1]} : vector<32x8xf32> to vector<8x8xf32>
    %c0_60 = arith.constant 0 : index
    %c3_61 = arith.constant 3 : index
    %c0_62 = arith.constant 0 : index
    %c0_63 = arith.constant 0 : index
    %64 = vector.load %arg11[%c0_60, %c3_61, %c0_62, %c0_63] : memref<1x4x8x8xf32, #tpu.memory_space<vmem>>, vector<1x1x8x8xf32>
    %65 = vector.shape_cast %64 : vector<1x1x8x8xf32> to vector<8x8xf32>
    %66 = vector.shape_cast %63 : vector<8x8xf32> to vector<1x1x8x8xf32>
    tpu.vector_store %arg11[%c0_60, %c3_61, %c0_62, %c0_63], %66 {strides = array<i32>} : memref<1x4x8x8xf32, #tpu.memory_space<vmem>>, vector<1x1x8x8xf32>,
    %67 = vector.extract_strided_slice %22 {offsets = [0, 24], sizes = [8, 8], strides = [1, 1]} : vector<8x32xf32> to vector<8x8xf32>
    %c0_64 = arith.constant 0 : index
    %c3_65 = arith.constant 3 : index
    %c0_66 = arith.constant 0 : index
    %c0_67 = arith.constant 0 : index
    %68 = vector.load %arg12[%c0_64, %c3_65, %c0_66, %c0_67] : memref<1x4x8x8xf32, #tpu.memory_space<vmem>>, vector<1x1x8x8xf32>
    %69 = vector.shape_cast %68 : vector<1x1x8x8xf32> to vector<8x8xf32>
    %70 = vector.shape_cast %67 : vector<8x8xf32> to vector<1x1x8x8xf32>
    tpu.vector_store %arg12[%c0_64, %c3_65, %c0_66, %c0_67], %70 {strides = array<i32>} : memref<1x4x8x8xf32, #tpu.memory_space<vmem>>, vector<1x1x8x8xf32>,
    return
  }
  func.func @transform_0(%arg0: i32) -> (i32, i32, i32) {
    %c0_i32 = arith.constant 0 : i32
    %c0_i32_0 = arith.constant 0 : i32
    %c0_i32_1 = arith.constant 0 : i32
    return %arg0, %c0_i32, %c0_i32_0 : i32, i32, i32
  }
  func.func @transform_1(%arg0: i32) -> (i32, i32, i32) {
    %c0_i32 = arith.constant 0 : i32
    %c0_i32_0 = arith.constant 0 : i32
    %c0_i32_1 = arith.constant 0 : i32
    return %arg0, %c0_i32, %c0_i32_0 : i32, i32, i32
  }
  func.func @transform_2(%arg0: i32) -> (i32, i32, i32) {
    %c0_i32 = arith.constant 0 : i32
    %c0_i32_0 = arith.constant 0 : i32
    %c0_i32_1 = arith.constant 0 : i32
    return %arg0, %c0_i32, %c0_i32_0 : i32, i32, i32
  }
  func.func @transform_3(%arg0: i32) -> (i32, i32) {
    %c0_i32 = arith.constant 0 : i32
    %c0_i32_0 = arith.constant 0 : i32
    %c0_i32_1 = arith.constant 0 : i32
    return %c0_i32, %c0_i32_0 : i32, i32
  }
  func.func @transform_4(%arg0: i32) -> (i32, i32) {
    %c0_i32 = arith.constant 0 : i32
    %c0_i32_0 = arith.constant 0 : i32
    %c0_i32_1 = arith.constant 0 : i32
    return %c0_i32, %c0_i32_0 : i32, i32
  }
  func.func @transform_5(%arg0: i32) -> (i32, i32) {
    %c0_i32 = arith.constant 0 : i32
    %c0_i32_0 = arith.constant 0 : i32
    %c0_i32_1 = arith.constant 0 : i32
    return %c0_i32, %c0_i32_0 : i32, i32
  }
  func.func @transform_6(%arg0: i32) -> (i32, i32) {
    %c0_i32 = arith.constant 0 : i32
    %c0_i32_0 = arith.constant 0 : i32
    %c0_i32_1 = arith.constant 0 : i32
    return %c0_i32, %c0_i32_0 : i32, i32
  }
  func.func @transform_7(%arg0: i32) -> (i32, i32) {
    %c0_i32 = arith.constant 0 : i32
    %c0_i32_0 = arith.constant 0 : i32
    %c0_i32_1 = arith.constant 0 : i32
    return %c0_i32, %c0_i32_0 : i32, i32
  }
  func.func @transform_8(%arg0: i32) -> (i32, i32) {
    %c0_i32 = arith.constant 0 : i32
    %c0_i32_0 = arith.constant 0 : i32
    %c0_i32_1 = arith.constant 0 : i32
    return %c0_i32, %c0_i32_0 : i32, i32
  }
  func.func @transform_9(%arg0: i32) -> (i32, i32, i32, i32) {
    %c0_i32 = arith.constant 0 : i32
    %c0_i32_0 = arith.constant 0 : i32
    %c0_i32_1 = arith.constant 0 : i32
    %c0_i32_2 = arith.constant 0 : i32
    return %arg0, %c0_i32, %c0_i32_0, %c0_i32_1 : i32, i32, i32, i32
  }
  func.func @transform_10(%arg0: i32) -> (i32, i32, i32, i32) {
    %c0_i32 = arith.constant 0 : i32
    %c0_i32_0 = arith.constant 0 : i32
    %c0_i32_1 = arith.constant 0 : i32
    %c0_i32_2 = arith.constant 0 : i32
    return %arg0, %c0_i32, %c0_i32_0, %c0_i32_1 : i32, i32, i32, i32
  }
  func.func @transform_11(%arg0: i32) -> (i32, i32, i32, i32) {
    %c0_i32 = arith.constant 0 : i32
    %c0_i32_0 = arith.constant 0 : i32
    %c0_i32_1 = arith.constant 0 : i32
    %c0_i32_2 = arith.constant 0 : i32
    return %arg0, %c0_i32, %c0_i32_0, %c0_i32_1 : i32, i32, i32, i32
  }
}

module attributes {stable_mosaic.version = 11 : i64} {
  func.func @qkv_project_kernel(%arg0: i32, %arg1: memref<1x8x32xf32, #tpu.memory_space<vmem>>, %arg2: memref<1x32x8xf32, #tpu.memory_space<vmem>>, %arg3: memref<1x8x32xf32, #tpu.memory_space<vmem>>, %arg4: memref<32x32xf32, #tpu.memory_space<vmem>>, %arg5: memref<1x32xf32, #tpu.memory_space<vmem>>, %arg6: memref<32x32xf32, #tpu.memory_space<vmem>>, %arg7: memref<32x1xf32, #tpu.memory_space<vmem>>, %arg8: memref<32x32xf32, #tpu.memory_space<vmem>>, %arg9: memref<1x32xf32, #tpu.memory_space<vmem>>, %arg10: memref<1x4x8x8xf32, #tpu.memory_space<vmem>>, %arg11: memref<1x4x8x8xf32, #tpu.memory_space<vmem>>, %arg12: memref<1x4x8x8xf32, #tpu.memory_space<vmem>>) attributes {dimension_semantics = [#tpu.dimension_semantics<parallel>], iteration_bounds = array<i64: 2>, scalar_prefetch = 0 : i64, scratch_operands = 0 : i64, tpu.core_type = #tpu.core_type<tc>, window_params = [{transform_indices = @transform_0, window_bounds = array<i64: 1, 8, 32>}, {transform_indices = @transform_1, window_bounds = array<i64: 1, 32, 8>}, {transform_indices = @transform_2, window_bounds = array<i64: 1, 8, 32>}, {pipeline_mode = #tpu.pipeline_mode<synchronous>, transform_indices = @transform_3, window_bounds = array<i64: 32, 32>}, {pipeline_mode = #tpu.pipeline_mode<synchronous>, transform_indices = @transform_4, window_bounds = array<i64: 1, 32>}, {pipeline_mode = #tpu.pipeline_mode<synchronous>, transform_indices = @transform_5, window_bounds = array<i64: 32, 32>}, {pipeline_mode = #tpu.pipeline_mode<synchronous>, transform_indices = @transform_6, window_bounds = array<i64: 32, 1>}, {pipeline_mode = #tpu.pipeline_mode<synchronous>, transform_indices = @transform_7, window_bounds = array<i64: 32, 32>}, {pipeline_mode = #tpu.pipeline_mode<synchronous>, transform_indices = @transform_8, window_bounds = array<i64: 1, 32>}, {transform_indices = @transform_9, window_bounds = array<i64: 1, 4, 8, 8>}, {transform_indices = @transform_10, window_bounds = array<i64: 1, 4, 8, 8>}, {transform_indices = @transform_11, window_bounds = array<i64: 1, 4, 8, 8>}]} {
    %c0 = arith.constant 0 : index
    %c0_0 = arith.constant 0 : index
    %c0_1 = arith.constant 0 : index
    %0 = vector.load %arg1[%c0, %c0_0, %c0_1] : memref<1x8x32xf32, #tpu.memory_space<vmem>>, vector<1x8x32xf32>
    %1 = vector.shape_cast %0 : vector<1x8x32xf32> to vector<8x32xf32>
    %c0_2 = arith.constant 0 : index
    %c0_3 = arith.constant 0 : index
    %c0_4 = arith.constant 0 : index
    %2 = vector.load %arg2[%c0_2, %c0_3, %c0_4] : memref<1x32x8xf32, #tpu.memory_space<vmem>>, vector<1x32x8xf32>
    %3 = vector.shape_cast %2 : vector<1x32x8xf32> to vector<32x8xf32>
    %c0_5 = arith.constant 0 : index
    %c0_6 = arith.constant 0 : index
    %c0_7 = arith.constant 0 : index
    %4 = vector.load %arg3[%c0_5, %c0_6, %c0_7] : memref<1x8x32xf32, #tpu.memory_space<vmem>>, vector<1x8x32xf32>
    %5 = vector.shape_cast %4 : vector<1x8x32xf32> to vector<8x32xf32>
    %c0_8 = arith.constant 0 : index
    %c0_9 = arith.constant 0 : index
    %6 = vector.load %arg4[%c0_8, %c0_9] : memref<32x32xf32, #tpu.memory_space<vmem>>, vector<32x32xf32>
    %cst = arith.constant dense<0.000000e+00> : vector<8x32xf32>
    %7 = tpu.matmul %1, %6, %cst {dimension_numbers = #tpu.dot_dimension_numbers<[1], [0], [0], [1], [0, 0, 1, 1], [], []>} : vector<8x32xf32>, vector<32x32xf32>, vector<8x32xf32> -> vector<8x32xf32>
    %c0_10 = arith.constant 0 : index
    %c0_11 = arith.constant 0 : index
    %8 = vector.load %arg5[%c0_10, %c0_11] : memref<1x32xf32, #tpu.memory_space<vmem>>, vector<1x32xf32>
    %9 = vector.broadcast %8 : vector<1x32xf32> to vector<8x32xf32>
    %10 = arith.addf %7, %9 : vector<8x32xf32>
    %cst_12 = arith.constant 0.353553385 : f32
    %11 = vector.broadcast %cst_12 : f32 to vector<8x32xf32>
    %12 = arith.mulf %10, %11 : vector<8x32xf32>
    %c0_13 = arith.constant 0 : index
    %c0_14 = arith.constant 0 : index
    %13 = vector.load %arg6[%c0_13, %c0_14] : memref<32x32xf32, #tpu.memory_space<vmem>>, vector<32x32xf32>
    %cst_15 = arith.constant dense<0.000000e+00> : vector<32x8xf32>
    %14 = tpu.matmul %13, %3, %cst_15 {dimension_numbers = #tpu.dot_dimension_numbers<[1], [0], [0], [1], [0, 0, 1, 1], [], []>} : vector<32x32xf32>, vector<32x8xf32>, vector<32x8xf32> -> vector<32x8xf32>
    %c0_16 = arith.constant 0 : index
    %c0_17 = arith.constant 0 : index
    %15 = vector.load %arg7[%c0_16, %c0_17] : memref<32x1xf32, #tpu.memory_space<vmem>>, vector<32x1xf32>
    %16 = vector.broadcast %15 : vector<32x1xf32> to vector<32x8xf32>
    %17 = arith.addf %14, %16 : vector<32x8xf32>
    %c0_18 = arith.constant 0 : index
    %c0_19 = arith.constant 0 : index
    %18 = vector.load %arg8[%c0_18, %c0_19] : memref<32x32xf32, #tpu.memory_space<vmem>>, vector<32x32xf32>
    %cst_20 = arith.constant dense<0.000000e+00> : vector<8x32xf32>
    %19 = tpu.matmul %5, %18, %cst_20 {dimension_numbers = #tpu.dot_dimension_numbers<[1], [0], [0], [1], [0, 0, 1, 1], [], []>} : vector<8x32xf32>, vector<32x32xf32>, vector<8x32xf32> -> vector<8x32xf32>
    %c0_21 = arith.constant 0 : index
    %c0_22 = arith.constant 0 : index
    %20 = vector.load %arg9[%c0_21, %c0_22] : memref<1x32xf32, #tpu.memory_space<vmem>>, vector<1x32xf32>
    %21 = vector.broadcast %20 : vector<1x32xf32> to vector<8x32xf32>
    %22 = arith.addf %19, %21 : vector<8x32xf32>
    %23 = vector.extract_strided_slice %12 {offsets = [0, 0], sizes = [8, 8], strides = [1, 1]} : vector<8x32xf32> to vector<8x8xf32>
    %c0_23 = arith.constant 0 : index
    %c0_24 = arith.constant 0 : index
    %c0_25 = arith.constant 0 : index
    %c0_26 = arith.constant 0 : index
    %24 = vector.load %arg10[%c0_23, %c0_24, %c0_25, %c0_26] : memref<1x4x8x8xf32, #tpu.memory_space<vmem>>, vector<1x1x8x8xf32>
    %25 = vector.shape_cast %24 : vector<1x1x8x8xf32> to vector<8x8xf32>
    %26 = vector.shape_cast %23 : vector<8x8xf32> to vector<1x1x8x8xf32>
    tpu.vector_store %arg10[%c0_23, %c0_24, %c0_25, %c0_26], %26 {strides = array<i32>} : memref<1x4x8x8xf32, #tpu.memory_space<vmem>>, vector<1x1x8x8xf32>,
    %27 = vector.extract_strided_slice %17 {offsets = [0, 0], sizes = [8, 8], strides = [1, 1]} : vector<32x8xf32> to vector<8x8xf32>
    %c0_27 = arith.constant 0 : index
    %c0_28 = arith.constant 0 : index
    %c0_29 = arith.constant 0 : index
    %c0_30 = arith.constant 0 : index
    %28 = vector.load %arg11[%c0_27, %c0_28, %c0_29, %c0_30] : memref<1x4x8x8xf32, #tpu.memory_space<vmem>>, vector<1x1x8x8xf32>
    %29 = vector.shape_cast %28 : vector<1x1x8x8xf32> to vector<8x8xf32>
    %30 = vector.shape_cast %27 : vector<8x8xf32> to vector<1x1x8x8xf32>
    tpu.vector_store %arg11[%c0_27, %c0_28, %c0_29, %c0_30], %30 {strides = array<i32>} : memref<1x4x8x8xf32, #tpu.memory_space<vmem>>, vector<1x1x8x8xf32>,
    %31 = vector.extract_strided_slice %22 {offsets = [0, 0], sizes = [8, 8], strides = [1, 1]} : vector<8x32xf32> to vector<8x8xf32>
    %c0_31 = arith.constant 0 : index
    %c0_32 = arith.constant 0 : index
    %c0_33 = arith.constant 0 : index
    %c0_34 = arith.constant 0 : index
    %32 = vector.load %arg12[%c0_31, %c0_32, %c0_33, %c0_34] : memref<1x4x8x8xf32, #tpu.memory_space<vmem>>, vector<1x1x8x8xf32>
    %33 = vector.shape_cast %32 : vector<1x1x8x8xf32> to vector<8x8xf32>
    %34 = vector.shape_cast %31 : vector<8x8xf32> to vector<1x1x8x8xf32>
    tpu.vector_store %arg12[%c0_31, %c0_32, %c0_33, %c0_34], %34 {strides = array<i32>} : memref<1x4x8x8xf32, #tpu.memory_space<vmem>>, vector<1x1x8x8xf32>,
    %35 = vector.extract_strided_slice %12 {offsets = [0, 8], sizes = [8, 8], strides = [1, 1]} : vector<8x32xf32> to vector<8x8xf32>
    %c0_35 = arith.constant 0 : index
    %c1 = arith.constant 1 : index
    %c0_36 = arith.constant 0 : index
    %c0_37 = arith.constant 0 : index
    %36 = vector.load %arg10[%c0_35, %c1, %c0_36, %c0_37] : memref<1x4x8x8xf32, #tpu.memory_space<vmem>>, vector<1x1x8x8xf32>
    %37 = vector.shape_cast %36 : vector<1x1x8x8xf32> to vector<8x8xf32>
    %38 = vector.shape_cast %35 : vector<8x8xf32> to vector<1x1x8x8xf32>
    tpu.vector_store %arg10[%c0_35, %c1, %c0_36, %c0_37], %38 {strides = array<i32>} : memref<1x4x8x8xf32, #tpu.memory_space<vmem>>, vector<1x1x8x8xf32>,
    %39 = vector.extract_strided_slice %17 {offsets = [8, 0], sizes = [8, 8], strides = [1, 1]} : vector<32x8xf32> to vector<8x8xf32>
    %c0_38 = arith.constant 0 : index
    %c1_39 = arith.constant 1 : index
    %c0_40 = arith.constant 0 : index
    %c0_41 = arith.constant 0 : index
    %40 = vector.load %arg11[%c0_38, %c1_39, %c0_40, %c0_41] : memref<1x4x8x8xf32, #tpu.memory_space<vmem>>, vector<1x1x8x8xf32>
    %41 = vector.shape_cast %40 : vector<1x1x8x8xf32> to vector<8x8xf32>
    %42 = vector.shape_cast %39 : vector<8x8xf32> to vector<1x1x8x8xf32>
    tpu.vector_store %arg11[%c0_38, %c1_39, %c0_40, %c0_41], %42 {strides = array<i32>} : memref<1x4x8x8xf32, #tpu.memory_space<vmem>>, vector<1x1x8x8xf32>,
    %43 = vector.extract_strided_slice %22 {offsets = [0, 8], sizes = [8, 8], strides = [1, 1]} : vector<8x32xf32> to vector<8x8xf32>
    %c0_42 = arith.constant 0 : index
    %c1_43 = arith.constant 1 : index
    %c0_44 = arith.constant 0 : index
    %c0_45 = arith.constant 0 : index
    %44 = vector.load %arg12[%c0_42, %c1_43, %c0_44, %c0_45] : memref<1x4x8x8xf32, #tpu.memory_space<vmem>>, vector<1x1x8x8xf32>
    %45 = vector.shape_cast %44 : vector<1x1x8x8xf32> to vector<8x8xf32>
    %46 = vector.shape_cast %43 : vector<8x8xf32> to vector<1x1x8x8xf32>
    tpu.vector_store %arg12[%c0_42, %c1_43, %c0_44, %c0_45], %46 {strides = array<i32>} : memref<1x4x8x8xf32, #tpu.memory_space<vmem>>, vector<1x1x8x8xf32>,
    %47 = vector.extract_strided_slice %12 {offsets = [0, 16], sizes = [8, 8], strides = [1, 1]} : vector<8x32xf32> to vector<8x8xf32>
    %c0_46 = arith.constant 0 : index
    %c2 = arith.constant 2 : index
    %c0_47 = arith.constant 0 : index
    %c0_48 = arith.constant 0 : index
    %48 = vector.load %arg10[%c0_46, %c2, %c0_47, %c0_48] : memref<1x4x8x8xf32, #tpu.memory_space<vmem>>, vector<1x1x8x8xf32>
    %49 = vector.shape_cast %48 : vector<1x1x8x8xf32> to vector<8x8xf32>
    %50 = vector.shape_cast %47 : vector<8x8xf32> to vector<1x1x8x8xf32>
    tpu.vector_store %arg10[%c0_46, %c2, %c0_47, %c0_48], %50 {strides = array<i32>} : memref<1x4x8x8xf32, #tpu.memory_space<vmem>>, vector<1x1x8x8xf32>,
    %51 = vector.extract_strided_slice %17 {offsets = [16, 0], sizes = [8, 8], strides = [1, 1]} : vector<32x8xf32> to vector<8x8xf32>
    %c0_49 = arith.constant 0 : index
    %c2_50 = arith.constant 2 : index
    %c0_51 = arith.constant 0 : index
    %c0_52 = arith.constant 0 : index
    %52 = vector.load %arg11[%c0_49, %c2_50, %c0_51, %c0_52] : memref<1x4x8x8xf32, #tpu.memory_space<vmem>>, vector<1x1x8x8xf32>
    %53 = vector.shape_cast %52 : vector<1x1x8x8xf32> to vector<8x8xf32>
    %54 = vector.shape_cast %51 : vector<8x8xf32> to vector<1x1x8x8xf32>
    tpu.vector_store %arg11[%c0_49, %c2_50, %c0_51, %c0_52], %54 {strides = array<i32>} : memref<1x4x8x8xf32, #tpu.memory_space<vmem>>, vector<1x1x8x8xf32>,
    %55 = vector.extract_strided_slice %22 {offsets = [0, 16], sizes = [8, 8], strides = [1, 1]} : vector<8x32xf32> to vector<8x8xf32>
    %c0_53 = arith.constant 0 : index
    %c2_54 = arith.constant 2 : index
    %c0_55 = arith.constant 0 : index
    %c0_56 = arith.constant 0 : index
    %56 = vector.load %arg12[%c0_53, %c2_54, %c0_55, %c0_56] : memref<1x4x8x8xf32, #tpu.memory_space<vmem>>, vector<1x1x8x8xf32>
    %57 = vector.shape_cast %56 : vector<1x1x8x8xf32> to vector<8x8xf32>
    %58 = vector.shape_cast %55 : vector<8x8xf32> to vector<1x1x8x8xf32>
    tpu.vector_store %arg12[%c0_53, %c2_54, %c0_55, %c0_56], %58 {strides = array<i32>} : memref<1x4x8x8xf32, #tpu.memory_space<vmem>>, vector<1x1x8x8xf32>,
    %59 = vector.extract_strided_slice %12 {offsets = [0, 24], sizes = [8, 8], strides = [1, 1]} : vector<8x32xf32> to vector<8x8xf32>
    %c0_57 = arith.constant 0 : index
    %c3 = arith.constant 3 : index
    %c0_58 = arith.constant 0 : index
    %c0_59 = arith.constant 0 : index
    %60 = vector.load %arg10[%c0_57, %c3, %c0_58, %c0_59] : memref<1x4x8x8xf32, #tpu.memory_space<vmem>>, vector<1x1x8x8xf32>
    %61 = vector.shape_cast %60 : vector<1x1x8x8xf32> to vector<8x8xf32>
    %62 = vector.shape_cast %59 : vector<8x8xf32> to vector<1x1x8x8xf32>
    tpu.vector_store %arg10[%c0_57, %c3, %c0_58, %c0_59], %62 {strides = array<i32>} : memref<1x4x8x8xf32, #tpu.memory_space<vmem>>, vector<1x1x8x8xf32>,
    %63 = vector.extract_strided_slice %17 {offsets = [24, 0], sizes = [8, 8], strides = [1, 1]} : vector<32x8xf32> to vector<8x8xf32>
    %c0_60 = arith.constant 0 : index
    %c3_61 = arith.constant 3 : index
    %c0_62 = arith.constant 0 : index
    %c0_63 = arith.constant 0 : index
    %64 = vector.load %arg11[%c0_60, %c3_61, %c0_62, %c0_63] : memref<1x4x8x8xf32, #tpu.memory_space<vmem>>, vector<1x1x8x8xf32>
    %65 = vector.shape_cast %64 : vector<1x1x8x8xf32> to vector<8x8xf32>
    %66 = vector.shape_cast %63 : vector<8x8xf32> to vector<1x1x8x8xf32>
    tpu.vector_store %arg11[%c0_60, %c3_61, %c0_62, %c0_63], %66 {strides = array<i32>} : memref<1x4x8x8xf32, #tpu.memory_space<vmem>>, vector<1x1x8x8xf32>,
    %67 = vector.extract_strided_slice %22 {offsets = [0, 24], sizes = [8, 8], strides = [1, 1]} : vector<8x32xf32> to vector<8x8xf32>
    %c0_64 = arith.constant 0 : index
    %c3_65 = arith.constant 3 : index
    %c0_66 = arith.constant 0 : index
    %c0_67 = arith.constant 0 : index
    %68 = vector.load %arg12[%c0_64, %c3_65, %c0_66, %c0_67] : memref<1x4x8x8xf32, #tpu.memory_space<vmem>>, vector<1x1x8x8xf32>
    %69 = vector.shape_cast %68 : vector<1x1x8x8xf32> to vector<8x8xf32>
    %70 = vector.shape_cast %67 : vector<8x8xf32> to vector<1x1x8x8xf32>
    tpu.vector_store %arg12[%c0_64, %c3_65, %c0_66, %c0_67], %70 {strides = array<i32>} : memref<1x4x8x8xf32, #tpu.memory_space<vmem>>, vector<1x1x8x8xf32>,
    return
  }
  func.func @transform_0(%arg0: i32) -> (i32, i32, i32) {
    %c0_i32 = arith.constant 0 : i32
    %c0_i32_0 = arith.constant 0 : i32
    %c0_i32_1 = arith.constant 0 : i32
    return %arg0, %c0_i32, %c0_i32_0 : i32, i32, i32
  }
  func.func @transform_1(%arg0: i32) -> (i32, i32, i32) {
    %c0_i32 = arith.constant 0 : i32
    %c0_i32_0 = arith.constant 0 : i32
    %c0_i32_1 = arith.constant 0 : i32
    return %arg0, %c0_i32, %c0_i32_0 : i32, i32, i32
  }
  func.func @transform_2(%arg0: i32) -> (i32, i32, i32) {
    %c0_i32 = arith.constant 0 : i32
    %c0_i32_0 = arith.constant 0 : i32
    %c0_i32_1 = arith.constant 0 : i32
    return %arg0, %c0_i32, %c0_i32_0 : i32, i32, i32
  }
  func.func @transform_3(%arg0: i32) -> (i32, i32) {
    %c0_i32 = arith.constant 0 : i32
    %c0_i32_0 = arith.constant 0 : i32
    %c0_i32_1 = arith.constant 0 : i32
    return %c0_i32, %c0_i32_0 : i32, i32
  }
  func.func @transform_4(%arg0: i32) -> (i32, i32) {
    %c0_i32 = arith.constant 0 : i32
    %c0_i32_0 = arith.constant 0 : i32
    %c0_i32_1 = arith.constant 0 : i32
    return %c0_i32, %c0_i32_0 : i32, i32
  }
  func.func @transform_5(%arg0: i32) -> (i32, i32) {
    %c0_i32 = arith.constant 0 : i32
    %c0_i32_0 = arith.constant 0 : i32
    %c0_i32_1 = arith.constant 0 : i32
    return %c0_i32, %c0_i32_0 : i32, i32
  }
  func.func @transform_6(%arg0: i32) -> (i32, i32) {
    %c0_i32 = arith.constant 0 : i32
    %c0_i32_0 = arith.constant 0 : i32
    %c0_i32_1 = arith.constant 0 : i32
    return %c0_i32, %c0_i32_0 : i32, i32
  }
  func.func @transform_7(%arg0: i32) -> (i32, i32) {
    %c0_i32 = arith.constant 0 : i32
    %c0_i32_0 = arith.constant 0 : i32
    %c0_i32_1 = arith.constant 0 : i32
    return %c0_i32, %c0_i32_0 : i32, i32
  }
  func.func @transform_8(%arg0: i32) -> (i32, i32) {
    %c0_i32 = arith.constant 0 : i32
    %c0_i32_0 = arith.constant 0 : i32
    %c0_i32_1 = arith.constant 0 : i32
    return %c0_i32, %c0_i32_0 : i32, i32
  }
  func.func @transform_9(%arg0: i32) -> (i32, i32, i32, i32) {
    %c0_i32 = arith.constant 0 : i32
    %c0_i32_0 = arith.constant 0 : i32
    %c0_i32_1 = arith.constant 0 : i32
    %c0_i32_2 = arith.constant 0 : i32
    return %arg0, %c0_i32, %c0_i32_0, %c0_i32_1 : i32, i32, i32, i32
  }
  func.func @transform_10(%arg0: i32) -> (i32, i32, i32, i32) {
    %c0_i32 = arith.constant 0 : i32
    %c0_i32_0 = arith.constant 0 : i32
    %c0_i32_1 = arith.constant 0 : i32
    %c0_i32_2 = arith.constant 0 : i32
    return %arg0, %c0_i32, %c0_i32_0, %c0_i32_1 : i32, i32, i32, i32
  }
  func.func @transform_11(%arg0: i32) -> (i32, i32, i32, i32) {
    %c0_i32 = arith.constant 0 : i32
    %c0_i32_0 = arith.constant 0 : i32
    %c0_i32_1 = arith.constant 0 : i32
    %c0_i32_2 = arith.constant 0 : i32
    return %arg0, %c0_i32, %c0_i32_0, %c0_i32_1 : i32, i32, i32, i32
  }
}

</mosaic_0001>

<llo_original>
// kernel: tpu_custom_call.1
$region0: #{tpu_custom_call.1}
  #allocation0 [shape = 'u32[]', space=smem, size = 0x4, offset = 0x4, fixed_abs, tag = 'smem constant byte address 0x4 - core index']
  #allocation1 [shape = 'u32[144,128]{1,0:T(1,128)}', space=vmem, size = 0x12000, scoped, tag = 'internal scratch']
  %s0 = inlined_call_operand.hbm [shape: f32[2,8,32], index: 0, kind: input, shape index: {}]
  %s1 = inlined_call_operand.hbm [shape: f32[2,32,8], index: 1, kind: input, shape index: {}]
  %s2 = inlined_call_operand.hbm [shape: f32[2,8,32], index: 2, kind: input, shape index: {}]
  %s3 = inlined_call_operand.hbm [shape: f32[32,32], index: 3, kind: input, shape index: {}]
  %s4 = inlined_call_operand.hbm [shape: f32[1,32], index: 4, kind: input, shape index: {}]
  %s5 = inlined_call_operand.hbm [shape: f32[32,32], index: 5, kind: input, shape index: {}]
  %s6 = inlined_call_operand.hbm [shape: f32[32,1], index: 6, kind: input, shape index: {}]
  %s7 = inlined_call_operand.hbm [shape: f32[32,32], index: 7, kind: input, shape index: {}]
  %s8 = inlined_call_operand.hbm [shape: f32[1,32], index: 8, kind: input, shape index: {}]
  %s9 = inlined_call_operand.hbm [shape: f32[2,4,8,8], index: 9, kind: output, shape index: {0}]
  %s10 = inlined_call_operand.hbm [shape: f32[2,4,8,8], index: 10, kind: output, shape index: {1}]
  %s11 = inlined_call_operand.hbm [shape: f32[2,4,8,8], index: 11, kind: output, shape index: {2}]
  %12 = xla_tuple %s9, %s10, %s11
  %s13 = sld [smem:[#allocation0]]
  $region121: #{tpu_custom_call.1} parent=0
    _
  %s15 = ssub.s32 1, %s13
  %s16 = scalar_select 0, %s15, %s13
  $region1: #{tpu_custom_call.1} parent=0
    #allocation2 [shape = 'u8[8192]{0}', space=vmem, size = 0x2000, scoped, tag = 'input window, operand 0']
    #allocation3 [shape = 's32[2]{0}', space=sflag, size = 0x8, scoped, tag = 'scoped memory for tpu_custom_call.1']
    #allocation4 [shape = 's32[2]{0}', space=sflag, size = 0x8, scoped, tag = 'scoped memory for tpu_custom_call.1']
    #allocation5 [shape = 'u8[32768]{0}', space=vmem, size = 0x8000, scoped, tag = 'input window, operand 1']
    #allocation6 [shape = 's32[2]{0}', space=sflag, size = 0x8, scoped, tag = 'scoped memory for tpu_custom_call.1']
    #allocation7 [shape = 'u8[8192]{0}', space=vmem, size = 0x2000, scoped, tag = 'input window, operand 2']
    #allocation8 [shape = 'u8[16384]{0}', space=vmem, size = 0x4000, scoped, tag = 'input window, operand 3, single buffered']
    #allocation9 [shape = 's32[1]{0}', space=sflag, size = 0x4, scoped, tag = 'scoped memory for tpu_custom_call.1']
    #allocation10 [shape = 'u8[512]{0}', space=vmem, size = 0x400, scoped, tag = 'input window, operand 4, single buffered']
    #allocation11 [shape = 'u8[16384]{0}', space=vmem, size = 0x4000, scoped, tag = 'input window, operand 5, single buffered']
    #allocation12 [shape = 's32[1]{0}', space=sflag, size = 0x4, scoped, tag = 'scoped memory for tpu_custom_call.1']
    #allocation13 [shape = 'u8[16384]{0}', space=vmem, size = 0x4000, scoped, tag = 'input window, operand 6, single buffered']
    #allocation14 [shape = 'u8[16384]{0}', space=vmem, size = 0x4000, scoped, tag = 'input window, operand 7, single buffered']
    #allocation15 [shape = 's32[1]{0}', space=sflag, size = 0x4, scoped, tag = 'scoped memory for tpu_custom_call.1']
    #allocation16 [shape = 'u8[512]{0}', space=vmem, size = 0x400, scoped, tag = 'input window, operand 8, single buffered']
    #allocation17 [shape = 'u8[32768]{0}', space=vmem, size = 0x8000, scoped, tag = 'output window, operand 0']
    #allocation18 [shape = 'u8[32768]{0}', space=vmem, size = 0x8000, scoped, tag = 'output window, operand 1']
    #allocation19 [shape = 's32[2]{0}', space=sflag, size = 0x8, scoped, tag = 'scoped memory for tpu_custom_call.1']
    #allocation20 [shape = 'u8[32768]{0}', space=vmem, size = 0x8000, scoped, tag = 'output window, operand 2']
    %17 = vsyncpa [#allocation3], 0
    %s18 = scalar_lea.sflag [#allocation3], 1
    %19 = vsyncpa %s18, 0
    %20 = vsyncpa [#allocation6], 0
    %s21 = scalar_lea.sflag [#allocation6], 1
    %22 = vsyncpa %s21, 0
    %23 = vsyncpa [#allocation9], 0
    %24 = vsyncpa [#allocation12], 0
    %25 = vsyncpa [#allocation15], 0
    %26 = vsyncpa [#allocation4], 0
    %s27 = scalar_lea.sflag [#allocation4], 1
    %28 = vsyncpa %s27, 0
    %29 = vsyncpa [#allocation19], 0
    %s30 = scalar_lea.sflag [#allocation19], 1
    %31 = vsyncpa %s30, 0
    loop: start=0, step=1, limit=4
    $region2: #{tpu_custom_call.1} parent=1 // loop_pre_header
      _
    $region3: #{tpu_custom_call.1} parent=1 // loop_header
      %s33 = sphi 0, %s37
      %p34 = scmp.ge.s32.totalorder %s33, 4
      %s43 = sphi 0, %s45
      %s46 = sphi 0, %s43
      %s47 = sphi 0, %s46
      %s63 = sphi 0, %s47
      %s69 = sphi 0, %s71
      %s72 = sphi 0, %s69
      %s73 = sphi 0, %s72
      %s89 = sphi 0, %s73
      %s95 = sphi 0, %s97
      %s98 = sphi 0, %s95
      %s99 = sphi 0, %s98
      %s115 = sphi 0, %s99
      %s119 = sphi 0, %s119
      %s121 = sphi 0, %s119
      %s122 = sphi 0, %s121
      %s136 = sphi 0, %s122
      %s140 = sphi 0, %s140
      %s142 = sphi 0, %s140
      %s143 = sphi 0, %s142
      %s157 = sphi 0, %s143
      %s161 = sphi 0, %s161
      %s163 = sphi 0, %s161
      %s164 = sphi 0, %s163
      %s178 = sphi 0, %s164
      %s182 = sphi 0, %s182
      %s184 = sphi 0, %s182
      %s185 = sphi 0, %s184
      %s199 = sphi 0, %s185
      %s203 = sphi 0, %s203
      %s205 = sphi 0, %s203
      %s206 = sphi 0, %s205
      %s220 = sphi 0, %s206
      %s224 = sphi 0, %s224
      %s226 = sphi 0, %s224
      %s227 = sphi 0, %s226
      %s241 = sphi 0, %s227
      %s247 = sphi 0, %s249
      %s250 = sphi 0, %s247
      %s251 = sphi 0, %s250
      %s267 = sphi 0, %s251
      %s273 = sphi 0, %s275
      %s276 = sphi 0, %s273
      %s277 = sphi 0, %s276
      %s293 = sphi 0, %s277
      %s299 = sphi 0, %s301
      %s302 = sphi 0, %s299
      %s303 = sphi 0, %s302
      %s319 = sphi 0, %s303
    $region4: #{tpu_custom_call.1} parent=1 // loop_header_branch
      %36 = sbr.rel (%p34) target = $region8
    $region5: #{tpu_custom_call.1} parent=1 // loop_body
      %s38 = ssub.s32 %s33, 1
      %s39 = ssub.s32 %s33, 2
      %s40 = sadd.s32 %s33, 1
      %s41 = ssub.s32 %s33, %s40
      %p42 = scmp.eq.s32.totalorder %s41, 0
      %s44 = sadd.s32 %s43, 1
      %s45 = scalar_select %p42, %s43, %s44
      %p48 = pneg %p42
      %p49 = scmp.eq.s32.totalorder %s33, 1
      %p50 = por %p48, %p49
      %p51 = scmp.ne.s32.totalorder %s43, %s46
      %p52 = scmp.eq.s32.totalorder %s33, 0
      %p53 = por %p51, %p52
      %p54 = scmp.ne.s32.totalorder %s43, %s46
      %p55 = scmp.eq.s32.totalorder %s38, 1
      %p56 = por %p54, %p55
      %p57 = scmp.ne.s32.totalorder %s46, %s47
      %p58 = scmp.eq.s32.totalorder %s38, 0
      %p59 = por %p57, %p58
      %p60 = scmp.ne.s32.totalorder %s46, %s47
      %p61 = scmp.eq.s32.totalorder %s39, 1
      %p62 = por %p60, %p61
      %p64 = scmp.ne.s32.totalorder %s47, %s63
      %p65 = scmp.eq.s32.totalorder %s39, 0
      %p66 = por %p64, %p65
      %s67 = ssub.s32 %s33, %s40
      %p68 = scmp.eq.s32.totalorder %s67, 0
      %s70 = sadd.s32 %s69, 1
      %s71 = scalar_select %p68, %s69, %s70
      %p74 = pneg %p68
      %p75 = scmp.eq.s32.totalorder %s33, 1
      %p76 = por %p74, %p75
      %p77 = scmp.ne.s32.totalorder %s69, %s72
      %p78 = scmp.eq.s32.totalorder %s33, 0
      %p79 = por %p77, %p78
      %p80 = scmp.ne.s32.totalorder %s69, %s72
      %p81 = scmp.eq.s32.totalorder %s38, 1
      %p82 = por %p80, %p81
      %p83 = scmp.ne.s32.totalorder %s72, %s73
      %p84 = scmp.eq.s32.totalorder %s38, 0
      %p85 = por %p83, %p84
      %p86 = scmp.ne.s32.totalorder %s72, %s73
      %p87 = scmp.eq.s32.totalorder %s39, 1
      %p88 = por %p86, %p87
      %p90 = scmp.ne.s32.totalorder %s73, %s89
      %p91 = scmp.eq.s32.totalorder %s39, 0
      %p92 = por %p90, %p91
      %s93 = ssub.s32 %s33, %s40
      %p94 = scmp.eq.s32.totalorder %s93, 0
      %s96 = sadd.s32 %s95, 1
      %s97 = scalar_select %p94, %s95, %s96
      %p100 = pneg %p94
      %p101 = scmp.eq.s32.totalorder %s33, 1
      %p102 = por %p100, %p101
      %p103 = scmp.ne.s32.totalorder %s95, %s98
      %p104 = scmp.eq.s32.totalorder %s33, 0
      %p105 = por %p103, %p104
      %p106 = scmp.ne.s32.totalorder %s95, %s98
      %p107 = scmp.eq.s32.totalorder %s38, 1
      %p108 = por %p106, %p107
      %p109 = scmp.ne.s32.totalorder %s98, %s99
      %p110 = scmp.eq.s32.totalorder %s38, 0
      %p111 = por %p109, %p110
      %p112 = scmp.ne.s32.totalorder %s98, %s99
      %p113 = scmp.eq.s32.totalorder %s39, 1
      %p114 = por %p112, %p113
      %p116 = scmp.ne.s32.totalorder %s99, %s115
      %p117 = scmp.eq.s32.totalorder %s39, 0
      %p118 = por %p116, %p117
      %s120 = sadd.s32 %s119, 1
      %p123 = scmp.eq.s32.totalorder %s33, 1
      %p124 = scmp.ne.s32.totalorder %s119, %s121
      %p125 = scmp.eq.s32.totalorder %s33, 0
      %p126 = por %p124, %p125
      %p127 = scmp.ne.s32.totalorder %s119, %s121
      %p128 = scmp.eq.s32.totalorder %s38, 1
      %p129 = por %p127, %p128
      %p130 = scmp.ne.s32.totalorder %s121, %s122
      %p131 = scmp.eq.s32.totalorder %s38, 0
      %p132 = por %p130, %p131
      %p133 = scmp.ne.s32.totalorder %s121, %s122
      %p134 = scmp.eq.s32.totalorder %s39, 1
      %p135 = por %p133, %p134
      %p137 = scmp.ne.s32.totalorder %s122, %s136
      %p138 = scmp.eq.s32.totalorder %s39, 0
      %p139 = por %p137, %p138
      %s141 = sadd.s32 %s140, 1
      %p144 = scmp.eq.s32.totalorder %s33, 1
      %p145 = scmp.ne.s32.totalorder %s140, %s142
      %p146 = scmp.eq.s32.totalorder %s33, 0
      %p147 = por %p145, %p146
      %p148 = scmp.ne.s32.totalorder %s140, %s142
      %p149 = scmp.eq.s32.totalorder %s38, 1
      %p150 = por %p148, %p149
      %p151 = scmp.ne.s32.totalorder %s142, %s143
      %p152 = scmp.eq.s32.totalorder %s38, 0
      %p153 = por %p151, %p152
      %p154 = scmp.ne.s32.totalorder %s142, %s143
      %p155 = scmp.eq.s32.totalorder %s39, 1
      %p156 = por %p154, %p155
      %p158 = scmp.ne.s32.totalorder %s143, %s157
      %p159 = scmp.eq.s32.totalorder %s39, 0
      %p160 = por %p158, %p159
      %s162 = sadd.s32 %s161, 1
      %p165 = scmp.eq.s32.totalorder %s33, 1
      %p166 = scmp.ne.s32.totalorder %s161, %s163
      %p167 = scmp.eq.s32.totalorder %s33, 0
      %p168 = por %p166, %p167
      %p169 = scmp.ne.s32.totalorder %s161, %s163
      %p170 = scmp.eq.s32.totalorder %s38, 1
      %p171 = por %p169, %p170
      %p172 = scmp.ne.s32.totalorder %s163, %s164
      %p173 = scmp.eq.s32.totalorder %s38, 0
      %p174 = por %p172, %p173
      %p175 = scmp.ne.s32.totalorder %s163, %s164
      %p176 = scmp.eq.s32.totalorder %s39, 1
      %p177 = por %p175, %p176
      %p179 = scmp.ne.s32.totalorder %s164, %s178
      %p180 = scmp.eq.s32.totalorder %s39, 0
      %p181 = por %p179, %p180
      %s183 = sadd.s32 %s182, 1
      %p186 = scmp.eq.s32.totalorder %s33, 1
      %p187 = scmp.ne.s32.totalorder %s182, %s184
      %p188 = scmp.eq.s32.totalorder %s33, 0
      %p189 = por %p187, %p188
      %p190 = scmp.ne.s32.totalorder %s182, %s184
      %p191 = scmp.eq.s32.totalorder %s38, 1
      %p192 = por %p190, %p191
      %p193 = scmp.ne.s32.totalorder %s184, %s185
      %p194 = scmp.eq.s32.totalorder %s38, 0
      %p195 = por %p193, %p194
      %p196 = scmp.ne.s32.totalorder %s184, %s185
      %p197 = scmp.eq.s32.totalorder %s39, 1
      %p198 = por %p196, %p197
      %p200 = scmp.ne.s32.totalorder %s185, %s199
      %p201 = scmp.eq.s32.totalorder %s39, 0
      %p202 = por %p200, %p201
      %s204 = sadd.s32 %s203, 1
      %p207 = scmp.eq.s32.totalorder %s33, 1
      %p208 = scmp.ne.s32.totalorder %s203, %s205
      %p209 = scmp.eq.s32.totalorder %s33, 0
      %p210 = por %p208, %p209
      %p211 = scmp.ne.s32.totalorder %s203, %s205
      %p212 = scmp.eq.s32.totalorder %s38, 1
      %p213 = por %p211, %p212
      %p214 = scmp.ne.s32.totalorder %s205, %s206
      %p215 = scmp.eq.s32.totalorder %s38, 0
      %p216 = por %p214, %p215
      %p217 = scmp.ne.s32.totalorder %s205, %s206
      %p218 = scmp.eq.s32.totalorder %s39, 1
      %p219 = por %p217, %p218
      %p221 = scmp.ne.s32.totalorder %s206, %s220
      %p222 = scmp.eq.s32.totalorder %s39, 0
      %p223 = por %p221, %p222
      %s225 = sadd.s32 %s224, 1
      %p228 = scmp.eq.s32.totalorder %s33, 1
      %p229 = scmp.ne.s32.totalorder %s224, %s226
      %p230 = scmp.eq.s32.totalorder %s33, 0
      %p231 = por %p229, %p230
      %p232 = scmp.ne.s32.totalorder %s224, %s226
      %p233 = scmp.eq.s32.totalorder %s38, 1
      %p234 = por %p232, %p233
      %p235 = scmp.ne.s32.totalorder %s226, %s227
      %p236 = scmp.eq.s32.totalorder %s38, 0
      %p237 = por %p235, %p236
      %p238 = scmp.ne.s32.totalorder %s226, %s227
      %p239 = scmp.eq.s32.totalorder %s39, 1
      %p240 = por %p238, %p239
      %p242 = scmp.ne.s32.totalorder %s227, %s241
      %p243 = scmp.eq.s32.totalorder %s39, 0
      %p244 = por %p242, %p243
      %s245 = ssub.s32 %s33, %s40
      %p246 = scmp.eq.s32.totalorder %s245, 0
      %s248 = sadd.s32 %s247, 1
      %s249 = scalar_select %p246, %s247, %s248
      %p252 = pneg %p246
      %p253 = scmp.eq.s32.totalorder %s33, 1
      %p254 = por %p252, %p253
      %p255 = scmp.ne.s32.totalorder %s247, %s250
      %p256 = scmp.eq.s32.totalorder %s33, 0
      %p257 = por %p255, %p256
      %p258 = scmp.ne.s32.totalorder %s247, %s250
      %p259 = scmp.eq.s32.totalorder %s38, 1
      %p260 = por %p258, %p259
      %p261 = scmp.ne.s32.totalorder %s250, %s251
      %p262 = scmp.eq.s32.totalorder %s38, 0
      %p263 = por %p261, %p262
      %p264 = scmp.ne.s32.totalorder %s250, %s251
      %p265 = scmp.eq.s32.totalorder %s39, 1
      %p266 = por %p264, %p265
      %p268 = scmp.ne.s32.totalorder %s251, %s267
      %p269 = scmp.eq.s32.totalorder %s39, 0
      %p270 = por %p268, %p269
      %s271 = ssub.s32 %s33, %s40
      %p272 = scmp.eq.s32.totalorder %s271, 0
      %s274 = sadd.s32 %s273, 1
      %s275 = scalar_select %p272, %s273, %s274
      %p278 = pneg %p272
      %p279 = scmp.eq.s32.totalorder %s33, 1
      %p280 = por %p278, %p279
      %p281 = scmp.ne.s32.totalorder %s273, %s276
      %p282 = scmp.eq.s32.totalorder %s33, 0
      %p283 = por %p281, %p282
      %p284 = scmp.ne.s32.totalorder %s273, %s276
      %p285 = scmp.eq.s32.totalorder %s38, 1
      %p286 = por %p284, %p285
      %p287 = scmp.ne.s32.totalorder %s276, %s277
      %p288 = scmp.eq.s32.totalorder %s38, 0
      %p289 = por %p287, %p288
      %p290 = scmp.ne.s32.totalorder %s276, %s277
      %p291 = scmp.eq.s32.totalorder %s39, 1
      %p292 = por %p290, %p291
      %p294 = scmp.ne.s32.totalorder %s277, %s293
      %p295 = scmp.eq.s32.totalorder %s39, 0
      %p296 = por %p294, %p295
      %s297 = ssub.s32 %s33, %s40
      %p298 = scmp.eq.s32.totalorder %s297, 0
      %s300 = sadd.s32 %s299, 1
      %s301 = scalar_select %p298, %s299, %s300
      %p304 = pneg %p298
      %p305 = scmp.eq.s32.totalorder %s33, 1
      %p306 = por %p304, %p305
      %p307 = scmp.ne.s32.totalorder %s299, %s302
      %p308 = scmp.eq.s32.totalorder %s33, 0
      %p309 = por %p307, %p308
      %p310 = scmp.ne.s32.totalorder %s299, %s302
      %p311 = scmp.eq.s32.totalorder %s38, 1
      %p312 = por %p310, %p311
      %p313 = scmp.ne.s32.totalorder %s302, %s303
      %p314 = scmp.eq.s32.totalorder %s38, 0
      %p315 = por %p313, %p314
      %p316 = scmp.ne.s32.totalorder %s302, %s303
      %p317 = scmp.eq.s32.totalorder %s39, 1
      %p318 = por %p316, %p317
      %p320 = scmp.ne.s32.totalorder %s303, %s319
      %p321 = scmp.eq.s32.totalorder %s39, 0
      %p322 = por %p320, %p321
      %p323 = scmp.le.s32.totalorder 1, %s33
      %p324 = scmp.lt.s32.totalorder %s33, 3
      %p325 = pnand %p323, %p324
      %p326 = pneg %p325
      // Predicated region
      $region9: #{tpu_custom_call.1} parent=5 // pred_check
        _
      $region10: #{tpu_custom_call.1} parent=5 // pred_check_branch
        %328 = sbr.rel (%p325) target = $region12
      $region11: #{tpu_custom_call.1} parent=5 // pred_region
        %s329 = ssub.s32 %s33, 1
        // Predicated region
        $region13: #{tpu_custom_call.1} parent=11 // pred_check
          %p330 = pneg %p132
        $region14: #{tpu_custom_call.1} parent=11 // pred_check_branch
          %332 = sbr.rel (%p330) target = $region16
        $region15: #{tpu_custom_call.1} parent=11 // pred_region
          %s334 = ssub.s32 512, 512
          %335 = vsyncadd [#allocation9], %s334
          %s336 = sshll.u32 [#allocation8], 4
          %s337 = int_to_ptr.vmem [resolvable:$true] %s336
          %342 = dma.hbm_to_vmem [thread:$0]  %s3, 512, %s337, [#allocation9], 128, 128, 8
        $region16: #{tpu_custom_call.1} parent=11 // pred_fallthru
          _
        // Predicated region
        $region17: #{tpu_custom_call.1} parent=11 // pred_check
          %p343 = pneg %p153
        $region18: #{tpu_custom_call.1} parent=11 // pred_check_branch
          %345 = sbr.rel (%p343) target = $region20
        $region19: #{tpu_custom_call.1} parent=11 // pred_region
          %s347 = ssub.s32 16, 16
          %348 = vsyncadd [#allocation9], %s347
          %s350 = sshll.u32 [#allocation10], 4
          %s351 = int_to_ptr.vmem [resolvable:$true] %s350
          %353 = dma.hbm_to_vmem [thread:$0]  %s4, 16, %s351, [#allocation9]
        $region20: #{tpu_custom_call.1} parent=11 // pred_fallthru
          _
        // Predicated region
        $region21: #{tpu_custom_call.1} parent=11 // pred_check
          %p354 = pneg %p174
        $region22: #{tpu_custom_call.1} parent=11 // pred_check_branch
          %356 = sbr.rel (%p354) target = $region24
        $region23: #{tpu_custom_call.1} parent=11 // pred_region
          %s358 = ssub.s32 512, 512
          %359 = vsyncadd [#allocation12], %s358
          %s360 = sshll.u32 [#allocation11], 4
          %s361 = int_to_ptr.vmem [resolvable:$true] %s360
          %366 = dma.hbm_to_vmem [thread:$0]  %s5, 512, %s361, [#allocation12], 128, 128, 8
        $region24: #{tpu_custom_call.1} parent=11 // pred_fallthru
          _
        // Predicated region
        $region25: #{tpu_custom_call.1} parent=11 // pred_check
          %p367 = pneg %p195
        $region26: #{tpu_custom_call.1} parent=11 // pred_check_branch
          %369 = sbr.rel (%p367) target = $region28
        $region27: #{tpu_custom_call.1} parent=11 // pred_region
          %s371 = ssub.s32 512, 512
          %372 = vsyncadd [#allocation12], %s371
          %s373 = sshll.u32 [#allocation13], 4
          %s374 = int_to_ptr.vmem [resolvable:$true] %s373
          %379 = dma.hbm_to_vmem [thread:$0]  %s6, 512, %s374, [#allocation12], 128, 128, 8
        $region28: #{tpu_custom_call.1} parent=11 // pred_fallthru
          _
        // Predicated region
        $region29: #{tpu_custom_call.1} parent=11 // pred_check
          %p380 = pneg %p216
        $region30: #{tpu_custom_call.1} parent=11 // pred_check_branch
          %382 = sbr.rel (%p380) target = $region32
        $region31: #{tpu_custom_call.1} parent=11 // pred_region
          %s384 = ssub.s32 512, 512
          %385 = vsyncadd [#allocation15], %s384
          %s386 = sshll.u32 [#allocation14], 4
          %s387 = int_to_ptr.vmem [resolvable:$true] %s386
          %392 = dma.hbm_to_vmem [thread:$0]  %s7, 512, %s387, [#allocation15], 128, 128, 8
        $region32: #{tpu_custom_call.1} parent=11 // pred_fallthru
          _
        // Predicated region
        $region33: #{tpu_custom_call.1} parent=11 // pred_check
          %p393 = pneg %p237
        $region34: #{tpu_custom_call.1} parent=11 // pred_check_branch
          %395 = sbr.rel (%p393) target = $region36
        $region35: #{tpu_custom_call.1} parent=11 // pred_region
          %s397 = ssub.s32 16, 16
          %398 = vsyncadd [#allocation15], %s397
          %s400 = sshll.u32 [#allocation16], 4
          %s401 = int_to_ptr.vmem [resolvable:$true] %s400
          %403 = dma.hbm_to_vmem [thread:$0]  %s8, 16, %s401, [#allocation15]
        $region36: #{tpu_custom_call.1} parent=11 // pred_fallthru
          _
      $region12: #{tpu_custom_call.1} parent=5 // pred_fallthru
        _
      %p404 = scmp.lt.s32.totalorder %s33, 2
      // Predicated region
      $region37: #{tpu_custom_call.1} parent=5 // pred_check
        %p405 = pneg %p404
      $region38: #{tpu_custom_call.1} parent=5 // pred_check_branch
        %407 = sbr.rel (%p405) target = $region40
      $region39: #{tpu_custom_call.1} parent=5 // pred_region
        // Predicated region
        $region41: #{tpu_custom_call.1} parent=39 // pred_check
          %p408 = pneg %p53
        $region42: #{tpu_custom_call.1} parent=39 // pred_check_branch
          %410 = sbr.rel (%p408) target = $region44
        $region43: #{tpu_custom_call.1} parent=39 // pred_region
          %s411 = sand.u32 %s43, 1
          %s412 = scalar_lea.sflag [#allocation3], %s411
          %s413 = sand.u32 %s43, 1
          %s414 = smul.addr %s413, 8
          %s415 = scalar_lea.vmem [#allocation2], %s414
          %s417 = ssub.s32 128, 128
          %418 = vsyncadd %s412, %s417
          %s419 = smul.addr %s33, 128
          %s420 = scalar_lea.hbm %s0, %s419
          %s422 = sshll.u32 %s415, 4
          %s423 = int_to_ptr.vmem [resolvable:$true] %s422
          %425 = dma.hbm_to_vmem [thread:$0]  %s420, 128, %s423, %s412
        $region44: #{tpu_custom_call.1} parent=39 // pred_fallthru
          _
        // Predicated region
        $region45: #{tpu_custom_call.1} parent=39 // pred_check
          %p426 = pneg %p79
        $region46: #{tpu_custom_call.1} parent=39 // pred_check_branch
          %428 = sbr.rel (%p426) target = $region48
        $region47: #{tpu_custom_call.1} parent=39 // pred_region
          %s429 = sand.u32 %s33, 1
          %s430 = scalar_lea.sflag [#allocation6], %s429
          %s431 = sand.u32 %s69, 1
          %s432 = smul.addr %s431, 32
          %s433 = scalar_lea.vmem [#allocation5], %s432
          %s435 = ssub.s32 512, 512
          %436 = vsyncadd %s430, %s435
          %s437 = smul.addr %s33, 4
          %s438 = smul.addr %s437, 128
          %s439 = scalar_lea.hbm %s1, %s438
          %s440 = sshll.u32 %s433, 4
          %s441 = int_to_ptr.vmem [resolvable:$true] %s440
          %446 = dma.hbm_to_vmem [thread:$0]  %s439, 512, %s441, %s430, 128, 128, 8
        $region48: #{tpu_custom_call.1} parent=39 // pred_fallthru
          _
        // Predicated region
        $region49: #{tpu_custom_call.1} parent=39 // pred_check
          %p447 = pneg %p105
        $region50: #{tpu_custom_call.1} parent=39 // pred_check_branch
          %449 = sbr.rel (%p447) target = $region52
        $region51: #{tpu_custom_call.1} parent=39 // pred_region
          %s450 = sand.u32 %s33, 1
          %s451 = scalar_lea.sflag [#allocation6], %s450
          %s452 = sand.u32 %s95, 1
          %s453 = smul.addr %s452, 8
          %s454 = scalar_lea.vmem [#allocation7], %s453
          %s456 = ssub.s32 128, 128
          %457 = vsyncadd %s451, %s456
          %s458 = smul.addr %s33, 128
          %s459 = scalar_lea.hbm %s2, %s458
          %s461 = sshll.u32 %s454, 4
          %s462 = int_to_ptr.vmem [resolvable:$true] %s461
          %464 = dma.hbm_to_vmem [thread:$0]  %s459, 128, %s462, %s451
        $region52: #{tpu_custom_call.1} parent=39 // pred_fallthru
          _
      $region40: #{tpu_custom_call.1} parent=5 // pred_fallthru
        _
      %p465 = scmp.le.s32.totalorder 1, %s33
      %p466 = scmp.lt.s32.totalorder %s33, 3
      %p467 = pnand %p465, %p466
      %p468 = pneg %p467
      // Predicated region
      $region53: #{tpu_custom_call.1} parent=5 // pred_check
        _
      $region54: #{tpu_custom_call.1} parent=5 // pred_check_branch
        %470 = sbr.rel (%p467) target = $region56
      $region55: #{tpu_custom_call.1} parent=5 // pred_region
        %s471 = ssub.s32 %s33, 1
        %s472 = sand.u32 %s46, 1
        %s473 = scalar_lea.sflag [#allocation3], %s472
        %s474 = sand.u32 %s46, 1
        %s475 = smul.addr %s474, 8
        %s476 = scalar_lea.vmem [#allocation2], %s475
        // Predicated region
        $region57: #{tpu_custom_call.1} parent=55 // pred_check
          %p477 = pneg %p59
        $region58: #{tpu_custom_call.1} parent=55 // pred_check_branch
          %479 = sbr.rel (%p477) target = $region60
        $region59: #{tpu_custom_call.1} parent=55 // pred_region
          %480 = dma.done %s473, 128
        $region60: #{tpu_custom_call.1} parent=55 // pred_fallthru
          _
        %s481 = sand.u32 %s38, 1
        %s482 = scalar_lea.sflag [#allocation6], %s481
        %s483 = sand.u32 %s72, 1
        %s484 = smul.addr %s483, 32
        %s485 = scalar_lea.vmem [#allocation5], %s484
        // Predicated region
        $region61: #{tpu_custom_call.1} parent=55 // pred_check
          %p486 = pneg %p85
        $region62: #{tpu_custom_call.1} parent=55 // pred_check_branch
          %488 = sbr.rel (%p486) target = $region64
        $region63: #{tpu_custom_call.1} parent=55 // pred_region
          %489 = dma.done %s482, 512
        $region64: #{tpu_custom_call.1} parent=55 // pred_fallthru
          _
        %s490 = sand.u32 %s38, 1
        %s491 = scalar_lea.sflag [#allocation6], %s490
        %s492 = sand.u32 %s98, 1
        %s493 = smul.addr %s492, 8
        %s494 = scalar_lea.vmem [#allocation7], %s493
        // Predicated region
        $region65: #{tpu_custom_call.1} parent=55 // pred_check
          %p495 = pneg %p111
        $region66: #{tpu_custom_call.1} parent=55 // pred_check_branch
          %497 = sbr.rel (%p495) target = $region68
        $region67: #{tpu_custom_call.1} parent=55 // pred_region
          %498 = dma.done %s491, 128
        $region68: #{tpu_custom_call.1} parent=55 // pred_fallthru
          _
        // Predicated region
        $region69: #{tpu_custom_call.1} parent=55 // pred_check
          %p499 = pneg %p132
        $region70: #{tpu_custom_call.1} parent=55 // pred_check_branch
          %501 = sbr.rel (%p499) target = $region72
        $region71: #{tpu_custom_call.1} parent=55 // pred_region
          %502 = dma.done [#allocation9], 512
        $region72: #{tpu_custom_call.1} parent=55 // pred_fallthru
          _
        // Predicated region
        $region73: #{tpu_custom_call.1} parent=55 // pred_check
          %p503 = pneg %p153
        $region74: #{tpu_custom_call.1} parent=55 // pred_check_branch
          %505 = sbr.rel (%p503) target = $region76
        $region75: #{tpu_custom_call.1} parent=55 // pred_region
          %506 = dma.done [#allocation9], 16
        $region76: #{tpu_custom_call.1} parent=55 // pred_fallthru
          _
        // Predicated region
        $region77: #{tpu_custom_call.1} parent=55 // pred_check
          %p507 = pneg %p174
        $region78: #{tpu_custom_call.1} parent=55 // pred_check_branch
          %509 = sbr.rel (%p507) target = $region80
        $region79: #{tpu_custom_call.1} parent=55 // pred_region
          %510 = dma.done [#allocation12], 512
        $region80: #{tpu_custom_call.1} parent=55 // pred_fallthru
          _
        // Predicated region
        $region81: #{tpu_custom_call.1} parent=55 // pred_check
          %p511 = pneg %p195
        $region82: #{tpu_custom_call.1} parent=55 // pred_check_branch
          %513 = sbr.rel (%p511) target = $region84
        $region83: #{tpu_custom_call.1} parent=55 // pred_region
          %514 = dma.done [#allocation12], 512
        $region84: #{tpu_custom_call.1} parent=55 // pred_fallthru
          _
        // Predicated region
        $region85: #{tpu_custom_call.1} parent=55 // pred_check
          %p515 = pneg %p216
        $region86: #{tpu_custom_call.1} parent=55 // pred_check_branch
          %517 = sbr.rel (%p515) target = $region88
        $region87: #{tpu_custom_call.1} parent=55 // pred_region
          %518 = dma.done [#allocation15], 512
        $region88: #{tpu_custom_call.1} parent=55 // pred_fallthru
          _
        // Predicated region
        $region89: #{tpu_custom_call.1} parent=55 // pred_check
          %p519 = pneg %p237
        $region90: #{tpu_custom_call.1} parent=55 // pred_check_branch
          %521 = sbr.rel (%p519) target = $region92
        $region91: #{tpu_custom_call.1} parent=55 // pred_region
          %522 = dma.done [#allocation15], 16
        $region92: #{tpu_custom_call.1} parent=55 // pred_fallthru
          _
        %s523 = sand.u32 %s46, 1
        %s524 = scalar_lea.sflag [#allocation3], %s523
        %s525 = sand.u32 %s46, 1
        %s526 = smul.addr %s525, 8
        %s527 = scalar_lea.vmem [#allocation2], %s526
        %p528 = pneg %p59
        %p529 = pneg %p56
        %s530 = sand.u32 %s38, 1
        %s531 = scalar_lea.sflag [#allocation6], %s530
        %s532 = sand.u32 %s72, 1
        %s533 = smul.addr %s532, 32
        %s534 = scalar_lea.vmem [#allocation5], %s533
        %p535 = pneg %p85
        %p536 = pneg %p82
        %s537 = sand.u32 %s38, 1
        %s538 = scalar_lea.sflag [#allocation6], %s537
        %s539 = sand.u32 %s98, 1
        %s540 = smul.addr %s539, 8
        %s541 = scalar_lea.vmem [#allocation7], %s540
        %p542 = pneg %p111
        %p543 = pneg %p108
        %p544 = pneg %p132
        %p545 = pneg %p129
        %p546 = pneg %p153
        %p547 = pneg %p150
        %p548 = pneg %p174
        %p549 = pneg %p171
        %p550 = pneg %p195
        %p551 = pneg %p192
        %p552 = pneg %p216
        %p553 = pneg %p213
        %p554 = pneg %p237
        %p555 = pneg %p234
        %p556 = pneg %p263
        %p557 = pneg %p260
        %s558 = sand.u32 %s250, 1
        %s559 = scalar_lea.sflag [#allocation4], %s558
        %s560 = sand.u32 %s250, 1
        %s561 = smul.addr %s560, 32
        %s562 = scalar_lea.vmem [#allocation17], %s561
        %p563 = pneg %p289
        %p564 = pneg %p286
        %s565 = sand.u32 %s38, 1
        %s566 = scalar_lea.sflag [#allocation19], %s565
        %s567 = sand.u32 %s276, 1
        %s568 = smul.addr %s567, 32
        %s569 = scalar_lea.vmem [#allocation18], %s568
        %p570 = pneg %p315
        %p571 = pneg %p312
        %s572 = sand.u32 %s38, 1
        %s573 = scalar_lea.sflag [#allocation19], %s572
        %s574 = sand.u32 %s302, 1
        %s575 = smul.addr %s574, 32
        %s576 = scalar_lea.vmem [#allocation20], %s575
        %v577 = vld [vmem:[%s476] sm:$0xff]
        %v578 = vld [vmem:[%s485] sm:$0xff]
        %v579 = vld [vmem:[%s485 + $0x8] sm:$0xff]
        %v580 = vld [vmem:[%s485 + $0x10] sm:$0xff]
        %v581 = vld [vmem:[%s485 + $0x18] sm:$0xff]
        %v582 = vld [vmem:[%s494] sm:$0xff]
        %v583 = vld [vmem:[#allocation8] sm:$0xff]
        %v584 = vld [vmem:[#allocation8 + $0x8] sm:$0xff]
        %v585 = vld [vmem:[#allocation8 + $0x10] sm:$0xff]
        %v586 = vld [vmem:[#allocation8 + $0x18] sm:$0xff]
        %v587 = vld [vmem:[#allocation10] sm:$0x1]
        %v589 = vlaneseq
        %v590 = vshrl.u32 %v589, 7
        %v591 = vsub.s32 0, %v590
        %v592 = vrot.slane %v587, %v591
        %vm594 = vcmask 261120
        %v596 = vsel %vm594, %v577, 0
        %598 = vmatprep.subr.mxu0 0.0
        %599 = vmatpush1.msra.mxu0 %v583
        %600 = vmatprep.subr.mxu0 0.0
        %601 = vmatpush1.msra.mxu0 %v584
        %602 = vmatprep.subr.mxu0 0.0
        %603 = vmatpush1.msra.mxu0 %v585
        %604 = vmatprep.subr.mxu0 0.0
        %605 = vmatpush1.msra.mxu0 %v586
        %606 = vmatprep.subr.mxu0 0.0
        %607 = vmatpush1.msra.mxu0 0.0
        %608 = vmatprep.subr.mxu0 0.0
        %609 = vmatpush1.msra.mxu0 0.0
        %610 = vmatprep.subr.mxu0 0.0
        %611 = vmatpush1.msra.mxu0 0.0
        %612 = vmatprep.subr.mxu0 0.0
        %613 = vmatpush1.msra.mxu0 0.0
        %614 = vmatprep.subr.mxu0 0.0
        %615 = vmatpush1.msra.mxu0 0.0
        %616 = vmatprep.subr.mxu0 0.0
        %617 = vmatpush1.msra.mxu0 0.0
        %618 = vmatprep.subr.mxu0 0.0
        %619 = vmatpush1.msra.mxu0 0.0
        %620 = vmatprep.subr.mxu0 0.0
        %621 = vmatpush1.msra.mxu0 0.0
        %622 = vmatprep.subr.mxu0 0.0
        %623 = vmatpush1.msra.mxu0 0.0
        %624 = vmatprep.subr.mxu0 0.0
        %625 = vmatpush1.msra.mxu0 0.0
        %626 = vmatprep.subr.mxu0 0.0
        %627 = vmatpush1.msra.mxu0 0.0
        %628 = vmatprep.subr.mxu0 0.0
        %629 = vmatpush1.msra.mxu0 0.0
        %630 = vmatprep.subr.mxu0 0.0
        %631 = vmatpush1.msra.mxu0 0.0
        %632 = vmatprep.subr.mxu0 0.0
        %633 = vmatpush1.msra.mxu0 0.0
        %634 = vmatprep.subr.mxu0 0.0
        %635 = vmatpush1.msra.mxu0 0.0
        %636 = vmatprep.subr.mxu0 0.0
        %637 = vmatpush1.msra.mxu0 0.0
        %638 = vmatprep.subr.mxu0 0.0
        %639 = vmatpush1.msra.mxu0 0.0
        %640 = vmatprep.subr.mxu0 0.0
        %641 = vmatpush1.msra.mxu0 0.0
        %642 = vmatprep.subr.mxu0 0.0
        %643 = vmatpush1.msra.mxu0 0.0
        %644 = vmatprep.subr.mxu0 0.0
        %645 = vmatpush1.msra.mxu0 0.0
        %646 = vmatprep.subr.mxu0 0.0
        %647 = vmatpush1.msra.mxu0 0.0
        %648 = vmatprep.subr.mxu0 0.0
        %649 = vmatpush1.msra.mxu0 0.0
        %650 = vmatprep.subr.mxu0 0.0
        %651 = vmatpush1.msra.mxu0 0.0
        %652 = vmatprep.subr.mxu0 0.0
        %653 = vmatpush1.msra.mxu0 0.0
        %654 = vmatprep.subr.mxu0 0.0
        %655 = vmatpush1.msra.mxu0 0.0
        %656 = vmatprep.subr.mxu0 0.0
        %657 = vmatpush1.msra.mxu0 0.0
        %658 = vmatprep.subr.mxu0 0.0
        %659 = vmatpush1.msra.mxu0 0.0
        %660 = vmatprep.subr.mxu0 0.0
        %661 = vmatpush1.msra.mxu0 0.0
        %662 = vmatprep.mubr.f32.mxu0 0.0
        %663 = vmatmul.mubr.f32.gmra.mrb[0].mxu0 %v596
        %v664 = vpop.f32.mrb[0].mxu0
        %v665 = vadd.f32 %v592, %v664
        %v666 = vpop.f32.mrb[0].mxu0
        %667 = vdwg.mxu0
        %v668 = vmul.f32 %v665, 0.35355338
        %v669 = vld [vmem:[#allocation11] sm:$0xff]
        %v670 = vld [vmem:[#allocation11 + $0x8] sm:$0xff]
        %v671 = vld [vmem:[#allocation11 + $0x10] sm:$0xff]
        %v672 = vld [vmem:[#allocation11 + $0x18] sm:$0xff]
        %v673 = vld [vmem:[#allocation13] sm:$0xff]
        %v674 = vld [vmem:[#allocation13 + $0x8] sm:$0xff]
        %v675 = vld [vmem:[#allocation13 + $0x10] sm:$0xff]
        %v676 = vld [vmem:[#allocation13 + $0x18] sm:$0xff]
        %678 = vset.pattern.permute.xlu0 0
        %679 = vperm.xlu0 %678, %v673
        %v680 = vpop.permute.xlu0 %679
        %683 = vset.pattern.permute.xlu0 0
        %684 = vperm.xlu0 %683, %v674
        %v685 = vpop.permute.xlu0 %684
        %688 = vset.pattern.permute.xlu0 0
        %689 = vperm.xlu0 %688, %v675
        %v690 = vpop.permute.xlu0 %689
        %693 = vset.pattern.permute.xlu0 0
        %694 = vperm.xlu0 %693, %v676
        %v695 = vpop.permute.xlu0 %694
        %v698 = vsel %vm594, %v669, 0
        %v701 = vsel %vm594, %v670, 0
        %v704 = vsel %vm594, %v671, 0
        %v707 = vsel %vm594, %v672, 0
        %709 = vmatprep.subr.mxu0 0.0
        %710 = vmatpush1.msra.mxu0 %v578
        %711 = vmatprep.subr.mxu0 0.0
        %712 = vmatpush1.msra.mxu0 %v579
        %713 = vmatprep.subr.mxu0 0.0
        %714 = vmatpush1.msra.mxu0 %v580
        %715 = vmatprep.subr.mxu0 0.0
        %716 = vmatpush1.msra.mxu0 %v581
        %717 = vmatprep.subr.mxu0 0.0
        %718 = vmatpush1.msra.mxu0 0.0
        %719 = vmatprep.subr.mxu0 0.0
        %720 = vmatpush1.msra.mxu0 0.0
        %721 = vmatprep.subr.mxu0 0.0
        %722 = vmatpush1.msra.mxu0 0.0
        %723 = vmatprep.subr.mxu0 0.0
        %724 = vmatpush1.msra.mxu0 0.0
        %725 = vmatprep.subr.mxu0 0.0
        %726 = vmatpush1.msra.mxu0 0.0
        %727 = vmatprep.subr.mxu0 0.0
        %728 = vmatpush1.msra.mxu0 0.0
        %729 = vmatprep.subr.mxu0 0.0
        %730 = vmatpush1.msra.mxu0 0.0
        %731 = vmatprep.subr.mxu0 0.0
        %732 = vmatpush1.msra.mxu0 0.0
        %733 = vmatprep.subr.mxu0 0.0
        %734 = vmatpush1.msra.mxu0 0.0
        %735 = vmatprep.subr.mxu0 0.0
        %736 = vmatpush1.msra.mxu0 0.0
        %737 = vmatprep.subr.mxu0 0.0
        %738 = vmatpush1.msra.mxu0 0.0
        %739 = vmatprep.subr.mxu0 0.0
        %740 = vmatpush1.msra.mxu0 0.0
        %741 = vmatprep.subr.mxu0 0.0
        %742 = vmatpush1.msra.mxu0 0.0
        %743 = vmatprep.subr.mxu0 0.0
        %744 = vmatpush1.msra.mxu0 0.0
        %745 = vmatprep.subr.mxu0 0.0
        %746 = vmatpush1.msra.mxu0 0.0
        %747 = vmatprep.subr.mxu0 0.0
        %748 = vmatpush1.msra.mxu0 0.0
        %749 = vmatprep.subr.mxu0 0.0
        %750 = vmatpush1.msra.mxu0 0.0
        %751 = vmatprep.subr.mxu0 0.0
        %752 = vmatpush1.msra.mxu0 0.0
        %753 = vmatprep.subr.mxu0 0.0
        %754 = vmatpush1.msra.mxu0 0.0
        %755 = vmatprep.subr.mxu0 0.0
        %756 = vmatpush1.msra.mxu0 0.0
        %757 = vmatprep.subr.mxu0 0.0
        %758 = vmatpush1.msra.mxu0 0.0
        %759 = vmatprep.subr.mxu0 0.0
        %760 = vmatpush1.msra.mxu0 0.0
        %761 = vmatprep.subr.mxu0 0.0
        %762 = vmatpush1.msra.mxu0 0.0
        %763 = vmatprep.subr.mxu0 0.0
        %764 = vmatpush1.msra.mxu0 0.0
        %765 = vmatprep.subr.mxu0 0.0
        %766 = vmatpush1.msra.mxu0 0.0
        %767 = vmatprep.subr.mxu0 0.0
        %768 = vmatpush1.msra.mxu0 0.0
        %769 = vmatprep.subr.mxu0 0.0
        %770 = vmatpush1.msra.mxu0 0.0
        %771 = vmatprep.subr.mxu0 0.0
        %772 = vmatpush1.msra.mxu0 0.0
        %773 = vmatprep.mubr.f32.mxu0 0.0
        %774 = vmatmul.mubr.f32.gmra.mrb[0].mxu0 %v698
        %v775 = vpop.f32.mrb[0].mxu0
        %v776 = vadd.f32 %v680, %v775
        %v777 = vpop.f32.mrb[0].mxu0
        %778 = vmatprep.mubr.f32.mxu0 0.0
        %779 = vmatmul.mubr.f32.gmra.mrb[0].mxu0 %v701
        %v780 = vpop.f32.mrb[0].mxu0
        %v781 = vadd.f32 %v685, %v780
        %v782 = vpop.f32.mrb[0].mxu0
        %783 = vmatprep.mubr.f32.mxu0 0.0
        %784 = vmatmul.mubr.f32.gmra.mrb[0].mxu0 %v704
        %v785 = vpop.f32.mrb[0].mxu0
        %v786 = vadd.f32 %v690, %v785
        %v787 = vpop.f32.mrb[0].mxu0
        %788 = vmatprep.mubr.f32.mxu0 0.0
        %789 = vmatmul.mubr.f32.gmra.mrb[0].mxu0 %v707
        %v790 = vpop.f32.mrb[0].mxu0
        %v791 = vadd.f32 %v695, %v790
        %v792 = vpop.f32.mrb[0].mxu0
        %793 = vdwg.mxu0
        %v794 = vld [vmem:[#allocation14] sm:$0xff]
        %v795 = vld [vmem:[#allocation14 + $0x8] sm:$0xff]
        %v796 = vld [vmem:[#allocation14 + $0x10] sm:$0xff]
        %v797 = vld [vmem:[#allocation14 + $0x18] sm:$0xff]
        %v798 = vld [vmem:[#allocation16] sm:$0x1]
        %v800 = vlaneseq
        %v801 = vshrl.u32 %v800, 7
        %v802 = vsub.s32 0, %v801
        %v803 = vrot.slane %v798, %v802
        %v806 = vsel %vm594, %v582, 0
        %808 = vmatprep.subr.mxu0 0.0
        %809 = vmatpush1.msra.mxu0 %v794
        %810 = vmatprep.subr.mxu0 0.0
        %811 = vmatpush1.msra.mxu0 %v795
        %812 = vmatprep.subr.mxu0 0.0
        %813 = vmatpush1.msra.mxu0 %v796
        %814 = vmatprep.subr.mxu0 0.0
        %815 = vmatpush1.msra.mxu0 %v797
        %816 = vmatprep.subr.mxu0 0.0
        %817 = vmatpush1.msra.mxu0 0.0
        %818 = vmatprep.subr.mxu0 0.0
        %819 = vmatpush1.msra.mxu0 0.0
        %820 = vmatprep.subr.mxu0 0.0
        %821 = vmatpush1.msra.mxu0 0.0
        %822 = vmatprep.subr.mxu0 0.0
        %823 = vmatpush1.msra.mxu0 0.0
        %824 = vmatprep.subr.mxu0 0.0
        %825 = vmatpush1.msra.mxu0 0.0
        %826 = vmatprep.subr.mxu0 0.0
        %827 = vmatpush1.msra.mxu0 0.0
        %828 = vmatprep.subr.mxu0 0.0
        %829 = vmatpush1.msra.mxu0 0.0
        %830 = vmatprep.subr.mxu0 0.0
        %831 = vmatpush1.msra.mxu0 0.0
        %832 = vmatprep.subr.mxu0 0.0
        %833 = vmatpush1.msra.mxu0 0.0
        %834 = vmatprep.subr.mxu0 0.0
        %835 = vmatpush1.msra.mxu0 0.0
        %836 = vmatprep.subr.mxu0 0.0
        %837 = vmatpush1.msra.mxu0 0.0
        %838 = vmatprep.subr.mxu0 0.0
        %839 = vmatpush1.msra.mxu0 0.0
        %840 = vmatprep.subr.mxu0 0.0
        %841 = vmatpush1.msra.mxu0 0.0
        %842 = vmatprep.subr.mxu0 0.0
        %843 = vmatpush1.msra.mxu0 0.0
        %844 = vmatprep.subr.mxu0 0.0
        %845 = vmatpush1.msra.mxu0 0.0
        %846 = vmatprep.subr.mxu0 0.0
        %847 = vmatpush1.msra.mxu0 0.0
        %848 = vmatprep.subr.mxu0 0.0
        %849 = vmatpush1.msra.mxu0 0.0
        %850 = vmatprep.subr.mxu0 0.0
        %851 = vmatpush1.msra.mxu0 0.0
        %852 = vmatprep.subr.mxu0 0.0
        %853 = vmatpush1.msra.mxu0 0.0
        %854 = vmatprep.subr.mxu0 0.0
        %855 = vmatpush1.msra.mxu0 0.0
        %856 = vmatprep.subr.mxu0 0.0
        %857 = vmatpush1.msra.mxu0 0.0
        %858 = vmatprep.subr.mxu0 0.0
        %859 = vmatpush1.msra.mxu0 0.0
        %860 = vmatprep.subr.mxu0 0.0
        %861 = vmatpush1.msra.mxu0 0.0
        %862 = vmatprep.subr.mxu0 0.0
        %863 = vmatpush1.msra.mxu0 0.0
        %864 = vmatprep.subr.mxu0 0.0
        %865 = vmatpush1.msra.mxu0 0.0
        %866 = vmatprep.subr.mxu0 0.0
        %867 = vmatpush1.msra.mxu0 0.0
        %868 = vmatprep.subr.mxu0 0.0
        %869 = vmatpush1.msra.mxu0 0.0
        %870 = vmatprep.subr.mxu0 0.0
        %871 = vmatpush1.msra.mxu0 0.0
        %872 = vmatprep.mubr.f32.mxu0 0.0
        %873 = vmatmul.mubr.f32.gmra.mrb[0].mxu0 %v806
        %v874 = vpop.f32.mrb[0].mxu0
        %v875 = vadd.f32 %v803, %v874
        %v876 = vpop.f32.mrb[0].mxu0
        %877 = vdwg.mxu0
        %vm878 = vcmask 64512
        %879 = vst.msk [vmem:[%s562] sm:$0xff] %vm878, %v668
        %880 = vst.msk [vmem:[%s569] sm:$0xff] %vm878, %v776
        %881 = vst.msk [vmem:[%s576] sm:$0xff] %vm878, %v875
        %883 = vrot.lane.b32.xlu0 %v668, 120
        %v884 = vpop.permute.xlu0 %883
        %s886 = scalar_lea.vmem %s562, 8 [#allocation17]
        %887 = vst.msk [vmem:[%s886] sm:$0xff] %vm878, %v884
        %s888 = scalar_lea.vmem %s569, 8 [#allocation18]
        %889 = vst.msk [vmem:[%s888] sm:$0xff] %vm878, %v781
        %891 = vrot.lane.b32.xlu0 %v875, 120
        %v892 = vpop.permute.xlu0 %891
        %s894 = scalar_lea.vmem %s576, 8 [#allocation20]
        %895 = vst.msk [vmem:[%s894] sm:$0xff] %vm878, %v892
        %896 = vrot.lane.b32.xlu0 %v668, 112
        %v897 = vpop.permute.xlu0 %896
        %s899 = scalar_lea.vmem %s562, 16 [#allocation17]
        %900 = vst.msk [vmem:[%s899] sm:$0xff] %vm878, %v897
        %s901 = scalar_lea.vmem %s569, 16 [#allocation18]
        %902 = vst.msk [vmem:[%s901] sm:$0xff] %vm878, %v786
        %903 = vrot.lane.b32.xlu0 %v875, 112
        %v904 = vpop.permute.xlu0 %903
        %s906 = scalar_lea.vmem %s576, 16 [#allocation20]
        %907 = vst.msk [vmem:[%s906] sm:$0xff] %vm878, %v904
        %908 = vrot.lane.b32.xlu0 %v668, 104
        %v909 = vpop.permute.xlu0 %908
        %s911 = scalar_lea.vmem %s562, 24 [#allocation17]
        %912 = vst.msk [vmem:[%s911] sm:$0xff] %vm878, %v909
        %s913 = scalar_lea.vmem %s569, 24 [#allocation18]
        %914 = vst.msk [vmem:[%s913] sm:$0xff] %vm878, %v791
        %915 = vrot.lane.b32.xlu0 %v875, 104
        %v916 = vpop.permute.xlu0 %915
        %s918 = scalar_lea.vmem %s576, 24 [#allocation20]
        %919 = vst.msk [vmem:[%s918] sm:$0xff] %vm878, %v916
        %s920 = sand.u32 %s250, 1
        %s921 = scalar_lea.sflag [#allocation4], %s920
        %s922 = sand.u32 %s250, 1
        %s923 = smul.addr %s922, 32
        %s924 = scalar_lea.vmem [#allocation17], %s923
        %s925 = sand.u32 %s38, 1
        %s926 = scalar_lea.sflag [#allocation19], %s925
        %s927 = sand.u32 %s276, 1
        %s928 = smul.addr %s927, 32
        %s929 = scalar_lea.vmem [#allocation18], %s928
        %s930 = sand.u32 %s38, 1
        %s931 = scalar_lea.sflag [#allocation19], %s930
        %s932 = sand.u32 %s302, 1
        %s933 = smul.addr %s932, 32
        %s934 = scalar_lea.vmem [#allocation20], %s933
        // Predicated region
        $region93: #{tpu_custom_call.1} parent=55 // pred_check
          %p935 = pneg %p260
        $region94: #{tpu_custom_call.1} parent=55 // pred_check_branch
          %937 = sbr.rel (%p935) target = $region96
        $region95: #{tpu_custom_call.1} parent=55 // pred_region
          %s939 = ssub.s32 512, 512
          %940 = vsyncadd %s921, %s939
          %s941 = smul.addr %s38, 4
          %s942 = smul.addr %s941, 128
          %s943 = scalar_lea.hbm %s9, %s942
          %s944 = sshll.u32 %s924, 4
          %s945 = int_to_ptr.vmem [resolvable:$true] %s944
          %950 = dma.vmem_to_hbm [thread:$0]  %s945, 512, %s943, %s921, 128, 128, 8
        $region96: #{tpu_custom_call.1} parent=55 // pred_fallthru
          _
        // Predicated region
        $region97: #{tpu_custom_call.1} parent=55 // pred_check
          %p951 = pneg %p286
        $region98: #{tpu_custom_call.1} parent=55 // pred_check_branch
          %953 = sbr.rel (%p951) target = $region100
        $region99: #{tpu_custom_call.1} parent=55 // pred_region
          %s955 = ssub.s32 512, 512
          %956 = vsyncadd %s926, %s955
          %s957 = smul.addr %s38, 4
          %s958 = smul.addr %s957, 128
          %s959 = scalar_lea.hbm %s10, %s958
          %s960 = sshll.u32 %s929, 4
          %s961 = int_to_ptr.vmem [resolvable:$true] %s960
          %966 = dma.vmem_to_hbm [thread:$0]  %s961, 512, %s959, %s926, 128, 128, 8
        $region100: #{tpu_custom_call.1} parent=55 // pred_fallthru
          _
        // Predicated region
        $region101: #{tpu_custom_call.1} parent=55 // pred_check
          %p967 = pneg %p312
        $region102: #{tpu_custom_call.1} parent=55 // pred_check_branch
          %969 = sbr.rel (%p967) target = $region104
        $region103: #{tpu_custom_call.1} parent=55 // pred_region
          %s971 = ssub.s32 512, 512
          %972 = vsyncadd %s931, %s971
          %s973 = smul.addr %s38, 4
          %s974 = smul.addr %s973, 128
          %s975 = scalar_lea.hbm %s11, %s974
          %s976 = sshll.u32 %s934, 4
          %s977 = int_to_ptr.vmem [resolvable:$true] %s976
          %982 = dma.vmem_to_hbm [thread:$0]  %s977, 512, %s975, %s931, 128, 128, 8
        $region104: #{tpu_custom_call.1} parent=55 // pred_fallthru
          _
      $region56: #{tpu_custom_call.1} parent=5 // pred_fallthru
        _
      %p983 = scmp.le.s32.totalorder 2, %s33
      // Predicated region
      $region105: #{tpu_custom_call.1} parent=5 // pred_check
        %p984 = pneg %p983
      $region106: #{tpu_custom_call.1} parent=5 // pred_check_branch
        %986 = sbr.rel (%p984) target = $region108
      $region107: #{tpu_custom_call.1} parent=5 // pred_region
        %s987 = ssub.s32 %s33, 2
        // Predicated region
        $region109: #{tpu_custom_call.1} parent=107 // pred_check
          %p988 = pneg %p266
        $region110: #{tpu_custom_call.1} parent=107 // pred_check_branch
          %990 = sbr.rel (%p988) target = $region112
        $region111: #{tpu_custom_call.1} parent=107 // pred_region
          %s991 = sand.u32 %s251, 1
          %s992 = scalar_lea.sflag [#allocation4], %s991
          %s993 = sand.u32 %s251, 1
          %s994 = smul.addr %s993, 32
          %s995 = scalar_lea.vmem [#allocation17], %s994
          %996 = dma.done %s992, 512
        $region112: #{tpu_custom_call.1} parent=107 // pred_fallthru
          _
        // Predicated region
        $region113: #{tpu_custom_call.1} parent=107 // pred_check
          %p997 = pneg %p292
        $region114: #{tpu_custom_call.1} parent=107 // pred_check_branch
          %999 = sbr.rel (%p997) target = $region116
        $region115: #{tpu_custom_call.1} parent=107 // pred_region
          %s1000 = sand.u32 %s39, 1
          %s1001 = scalar_lea.sflag [#allocation19], %s1000
          %s1002 = sand.u32 %s277, 1
          %s1003 = smul.addr %s1002, 32
          %s1004 = scalar_lea.vmem [#allocation18], %s1003
          %1005 = dma.done %s1001, 512
        $region116: #{tpu_custom_call.1} parent=107 // pred_fallthru
          _
        // Predicated region
        $region117: #{tpu_custom_call.1} parent=107 // pred_check
          %p1006 = pneg %p318
        $region118: #{tpu_custom_call.1} parent=107 // pred_check_branch
          %1008 = sbr.rel (%p1006) target = $region120
        $region119: #{tpu_custom_call.1} parent=107 // pred_region
          %s1009 = sand.u32 %s39, 1
          %s1010 = scalar_lea.sflag [#allocation19], %s1009
          %s1011 = sand.u32 %s303, 1
          %s1012 = smul.addr %s1011, 32
          %s1013 = scalar_lea.vmem [#allocation20], %s1012
          %1014 = dma.done %s1010, 512
        $region120: #{tpu_custom_call.1} parent=107 // pred_fallthru
          _
      $region108: #{tpu_custom_call.1} parent=5 // pred_fallthru
        _
    $region6: #{tpu_custom_call.1} parent=1 // loop_footer
      %s37 = sadd.s32 1, %s33
    $region7: #{tpu_custom_call.1} parent=1 // loop_footer_branch
      %32 = sbr.rel target = $region3
    $region8: #{tpu_custom_call.1} parent=1 // loop_exit
      _
    %1015 = vsyncpa [#allocation3], 1
    %s1016 = scalar_lea.sflag [#allocation3], 1
    %1017 = vsyncpa %s1016, 1
    %1018 = vsyncpa [#allocation6], 1
    %s1019 = scalar_lea.sflag [#allocation6], 1
    %1020 = vsyncpa %s1019, 1
    %1021 = vsyncpa [#allocation9], 1
    %1022 = vsyncpa [#allocation12], 1
    %1023 = vsyncpa [#allocation15], 1
    %1024 = vsyncpa [#allocation4], 1
    %s1025 = scalar_lea.sflag [#allocation4], 1
    %1026 = vsyncpa %s1025, 1
    %1027 = vsyncpa [#allocation19], 1
    %s1028 = scalar_lea.sflag [#allocation19], 1
    %1029 = vsyncpa %s1028, 1

// kernel: tpu_custom_call.1
$region0: #{tpu_custom_call.1}
  #allocation0 [shape = 'u32[]', space=smem, size = 0x4, offset = 0x4, fixed_abs, tag = 'smem constant byte address 0x4 - core index']
  #allocation1 [shape = 'u32[144,128]{1,0:T(1,128)}', space=vmem, size = 0x12000, scoped, tag = 'internal scratch']
  %s0 = inlined_call_operand.hbm [shape: f32[2,8,32], index: 0, kind: input, shape index: {}]
  %s1 = inlined_call_operand.hbm [shape: f32[2,32,8], index: 1, kind: input, shape index: {}]
  %s2 = inlined_call_operand.hbm [shape: f32[2,8,32], index: 2, kind: input, shape index: {}]
  %s3 = inlined_call_operand.hbm [shape: f32[32,32], index: 3, kind: input, shape index: {}]
  %s4 = inlined_call_operand.hbm [shape: f32[1,32], index: 4, kind: input, shape index: {}]
  %s5 = inlined_call_operand.hbm [shape: f32[32,32], index: 5, kind: input, shape index: {}]
  %s6 = inlined_call_operand.hbm [shape: f32[32,1], index: 6, kind: input, shape index: {}]
  %s7 = inlined_call_operand.hbm [shape: f32[32,32], index: 7, kind: input, shape index: {}]
  %s8 = inlined_call_operand.hbm [shape: f32[1,32], index: 8, kind: input, shape index: {}]
  %s9 = inlined_call_operand.hbm [shape: f32[2,4,8,8], index: 9, kind: output, shape index: {0}]
  %s10 = inlined_call_operand.hbm [shape: f32[2,4,8,8], index: 10, kind: output, shape index: {1}]
  %s11 = inlined_call_operand.hbm [shape: f32[2,4,8,8], index: 11, kind: output, shape index: {2}]
  %12 = xla_tuple %s9, %s10, %s11
  %s13 = sld [smem:[#allocation0]]
  $region121: #{tpu_custom_call.1} parent=0
    _
  %s15 = ssub.s32 1, %s13
  %s16 = scalar_select 0, %s15, %s13
  $region1: #{tpu_custom_call.1} parent=0
    #allocation2 [shape = 'u8[8192]{0}', space=vmem, size = 0x2000, scoped, tag = 'input window, operand 0']
    #allocation3 [shape = 's32[2]{0}', space=sflag, size = 0x8, scoped, tag = 'scoped memory for tpu_custom_call.1']
    #allocation4 [shape = 's32[2]{0}', space=sflag, size = 0x8, scoped, tag = 'scoped memory for tpu_custom_call.1']
    #allocation5 [shape = 'u8[32768]{0}', space=vmem, size = 0x8000, scoped, tag = 'input window, operand 1']
    #allocation6 [shape = 's32[2]{0}', space=sflag, size = 0x8, scoped, tag = 'scoped memory for tpu_custom_call.1']
    #allocation7 [shape = 'u8[8192]{0}', space=vmem, size = 0x2000, scoped, tag = 'input window, operand 2']
    #allocation8 [shape = 'u8[16384]{0}', space=vmem, size = 0x4000, scoped, tag = 'input window, operand 3, single buffered']
    #allocation9 [shape = 's32[1]{0}', space=sflag, size = 0x4, scoped, tag = 'scoped memory for tpu_custom_call.1']
    #allocation10 [shape = 'u8[512]{0}', space=vmem, size = 0x400, scoped, tag = 'input window, operand 4, single buffered']
    #allocation11 [shape = 'u8[16384]{0}', space=vmem, size = 0x4000, scoped, tag = 'input window, operand 5, single buffered']
    #allocation12 [shape = 's32[1]{0}', space=sflag, size = 0x4, scoped, tag = 'scoped memory for tpu_custom_call.1']
    #allocation13 [shape = 'u8[16384]{0}', space=vmem, size = 0x4000, scoped, tag = 'input window, operand 6, single buffered']
    #allocation14 [shape = 'u8[16384]{0}', space=vmem, size = 0x4000, scoped, tag = 'input window, operand 7, single buffered']
    #allocation15 [shape = 's32[1]{0}', space=sflag, size = 0x4, scoped, tag = 'scoped memory for tpu_custom_call.1']
    #allocation16 [shape = 'u8[512]{0}', space=vmem, size = 0x400, scoped, tag = 'input window, operand 8, single buffered']
    #allocation17 [shape = 'u8[32768]{0}', space=vmem, size = 0x8000, scoped, tag = 'output window, operand 0']
    #allocation18 [shape = 'u8[32768]{0}', space=vmem, size = 0x8000, scoped, tag = 'output window, operand 1']
    #allocation19 [shape = 's32[2]{0}', space=sflag, size = 0x8, scoped, tag = 'scoped memory for tpu_custom_call.1']
    #allocation20 [shape = 'u8[32768]{0}', space=vmem, size = 0x8000, scoped, tag = 'output window, operand 2']
    %17 = vsyncpa [#allocation3], 0
    %s18 = scalar_lea.sflag [#allocation3], 1
    %19 = vsyncpa %s18, 0
    %20 = vsyncpa [#allocation6], 0
    %s21 = scalar_lea.sflag [#allocation6], 1
    %22 = vsyncpa %s21, 0
    %23 = vsyncpa [#allocation9], 0
    %24 = vsyncpa [#allocation12], 0
    %25 = vsyncpa [#allocation15], 0
    %26 = vsyncpa [#allocation4], 0
    %s27 = scalar_lea.sflag [#allocation4], 1
    %28 = vsyncpa %s27, 0
    %29 = vsyncpa [#allocation19], 0
    %s30 = scalar_lea.sflag [#allocation19], 1
    %31 = vsyncpa %s30, 0
    loop: start=0, step=1, limit=4
    $region2: #{tpu_custom_call.1} parent=1 // loop_pre_header
      _
    $region3: #{tpu_custom_call.1} parent=1 // loop_header
      %s33 = sphi 0, %s37
      %p34 = scmp.ge.s32.totalorder %s33, 4
      %s43 = sphi 0, %s45
      %s46 = sphi 0, %s43
      %s47 = sphi 0, %s46
      %s63 = sphi 0, %s47
      %s69 = sphi 0, %s71
      %s72 = sphi 0, %s69
      %s73 = sphi 0, %s72
      %s89 = sphi 0, %s73
      %s95 = sphi 0, %s97
      %s98 = sphi 0, %s95
      %s99 = sphi 0, %s98
      %s115 = sphi 0, %s99
      %s119 = sphi 0, %s119
      %s121 = sphi 0, %s119
      %s122 = sphi 0, %s121
      %s136 = sphi 0, %s122
      %s140 = sphi 0, %s140
      %s142 = sphi 0, %s140
      %s143 = sphi 0, %s142
      %s157 = sphi 0, %s143
      %s161 = sphi 0, %s161
      %s163 = sphi 0, %s161
      %s164 = sphi 0, %s163
      %s178 = sphi 0, %s164
      %s182 = sphi 0, %s182
      %s184 = sphi 0, %s182
      %s185 = sphi 0, %s184
      %s199 = sphi 0, %s185
      %s203 = sphi 0, %s203
      %s205 = sphi 0, %s203
      %s206 = sphi 0, %s205
      %s220 = sphi 0, %s206
      %s224 = sphi 0, %s224
      %s226 = sphi 0, %s224
      %s227 = sphi 0, %s226
      %s241 = sphi 0, %s227
      %s247 = sphi 0, %s249
      %s250 = sphi 0, %s247
      %s251 = sphi 0, %s250
      %s267 = sphi 0, %s251
      %s273 = sphi 0, %s275
      %s276 = sphi 0, %s273
      %s277 = sphi 0, %s276
      %s293 = sphi 0, %s277
      %s299 = sphi 0, %s301
      %s302 = sphi 0, %s299
      %s303 = sphi 0, %s302
      %s319 = sphi 0, %s303
    $region4: #{tpu_custom_call.1} parent=1 // loop_header_branch
      %36 = sbr.rel (%p34) target = $region8
    $region5: #{tpu_custom_call.1} parent=1 // loop_body
      %s38 = ssub.s32 %s33, 1
      %s39 = ssub.s32 %s33, 2
      %s40 = sadd.s32 %s33, 1
      %s41 = ssub.s32 %s33, %s40
      %p42 = scmp.eq.s32.totalorder %s41, 0
      %s44 = sadd.s32 %s43, 1
      %s45 = scalar_select %p42, %s43, %s44
      %p48 = pneg %p42
      %p49 = scmp.eq.s32.totalorder %s33, 1
      %p50 = por %p48, %p49
      %p51 = scmp.ne.s32.totalorder %s43, %s46
      %p52 = scmp.eq.s32.totalorder %s33, 0
      %p53 = por %p51, %p52
      %p54 = scmp.ne.s32.totalorder %s43, %s46
      %p55 = scmp.eq.s32.totalorder %s38, 1
      %p56 = por %p54, %p55
      %p57 = scmp.ne.s32.totalorder %s46, %s47
      %p58 = scmp.eq.s32.totalorder %s38, 0
      %p59 = por %p57, %p58
      %p60 = scmp.ne.s32.totalorder %s46, %s47
      %p61 = scmp.eq.s32.totalorder %s39, 1
      %p62 = por %p60, %p61
      %p64 = scmp.ne.s32.totalorder %s47, %s63
      %p65 = scmp.eq.s32.totalorder %s39, 0
      %p66 = por %p64, %p65
      %s67 = ssub.s32 %s33, %s40
      %p68 = scmp.eq.s32.totalorder %s67, 0
      %s70 = sadd.s32 %s69, 1
      %s71 = scalar_select %p68, %s69, %s70
      %p74 = pneg %p68
      %p75 = scmp.eq.s32.totalorder %s33, 1
      %p76 = por %p74, %p75
      %p77 = scmp.ne.s32.totalorder %s69, %s72
      %p78 = scmp.eq.s32.totalorder %s33, 0
      %p79 = por %p77, %p78
      %p80 = scmp.ne.s32.totalorder %s69, %s72
      %p81 = scmp.eq.s32.totalorder %s38, 1
      %p82 = por %p80, %p81
      %p83 = scmp.ne.s32.totalorder %s72, %s73
      %p84 = scmp.eq.s32.totalorder %s38, 0
      %p85 = por %p83, %p84
      %p86 = scmp.ne.s32.totalorder %s72, %s73
      %p87 = scmp.eq.s32.totalorder %s39, 1
      %p88 = por %p86, %p87
      %p90 = scmp.ne.s32.totalorder %s73, %s89
      %p91 = scmp.eq.s32.totalorder %s39, 0
      %p92 = por %p90, %p91
      %s93 = ssub.s32 %s33, %s40
      %p94 = scmp.eq.s32.totalorder %s93, 0
      %s96 = sadd.s32 %s95, 1
      %s97 = scalar_select %p94, %s95, %s96
      %p100 = pneg %p94
      %p101 = scmp.eq.s32.totalorder %s33, 1
      %p102 = por %p100, %p101
      %p103 = scmp.ne.s32.totalorder %s95, %s98
      %p104 = scmp.eq.s32.totalorder %s33, 0
      %p105 = por %p103, %p104
      %p106 = scmp.ne.s32.totalorder %s95, %s98
      %p107 = scmp.eq.s32.totalorder %s38, 1
      %p108 = por %p106, %p107
      %p109 = scmp.ne.s32.totalorder %s98, %s99
      %p110 = scmp.eq.s32.totalorder %s38, 0
      %p111 = por %p109, %p110
      %p112 = scmp.ne.s32.totalorder %s98, %s99
      %p113 = scmp.eq.s32.totalorder %s39, 1
      %p114 = por %p112, %p113
      %p116 = scmp.ne.s32.totalorder %s99, %s115
      %p117 = scmp.eq.s32.totalorder %s39, 0
      %p118 = por %p116, %p117
      %s120 = sadd.s32 %s119, 1
      %p123 = scmp.eq.s32.totalorder %s33, 1
      %p124 = scmp.ne.s32.totalorder %s119, %s121
      %p125 = scmp.eq.s32.totalorder %s33, 0
      %p126 = por %p124, %p125
      %p127 = scmp.ne.s32.totalorder %s119, %s121
      %p128 = scmp.eq.s32.totalorder %s38, 1
      %p129 = por %p127, %p128
      %p130 = scmp.ne.s32.totalorder %s121, %s122
      %p131 = scmp.eq.s32.totalorder %s38, 0
      %p132 = por %p130, %p131
      %p133 = scmp.ne.s32.totalorder %s121, %s122
      %p134 = scmp.eq.s32.totalorder %s39, 1
      %p135 = por %p133, %p134
      %p137 = scmp.ne.s32.totalorder %s122, %s136
      %p138 = scmp.eq.s32.totalorder %s39, 0
      %p139 = por %p137, %p138
      %s141 = sadd.s32 %s140, 1
      %p144 = scmp.eq.s32.totalorder %s33, 1
      %p145 = scmp.ne.s32.totalorder %s140, %s142
      %p146 = scmp.eq.s32.totalorder %s33, 0
      %p147 = por %p145, %p146
      %p148 = scmp.ne.s32.totalorder %s140, %s142
      %p149 = scmp.eq.s32.totalorder %s38, 1
      %p150 = por %p148, %p149
      %p151 = scmp.ne.s32.totalorder %s142, %s143
      %p152 = scmp.eq.s32.totalorder %s38, 0
      %p153 = por %p151, %p152
      %p154 = scmp.ne.s32.totalorder %s142, %s143
      %p155 = scmp.eq.s32.totalorder %s39, 1
      %p156 = por %p154, %p155
      %p158 = scmp.ne.s32.totalorder %s143, %s157
      %p159 = scmp.eq.s32.totalorder %s39, 0
      %p160 = por %p158, %p159
      %s162 = sadd.s32 %s161, 1
      %p165 = scmp.eq.s32.totalorder %s33, 1
      %p166 = scmp.ne.s32.totalorder %s161, %s163
      %p167 = scmp.eq.s32.totalorder %s33, 0
      %p168 = por %p166, %p167
      %p169 = scmp.ne.s32.totalorder %s161, %s163
      %p170 = scmp.eq.s32.totalorder %s38, 1
      %p171 = por %p169, %p170
      %p172 = scmp.ne.s32.totalorder %s163, %s164
      %p173 = scmp.eq.s32.totalorder %s38, 0
      %p174 = por %p172, %p173
      %p175 = scmp.ne.s32.totalorder %s163, %s164
      %p176 = scmp.eq.s32.totalorder %s39, 1
      %p177 = por %p175, %p176
      %p179 = scmp.ne.s32.totalorder %s164, %s178
      %p180 = scmp.eq.s32.totalorder %s39, 0
      %p181 = por %p179, %p180
      %s183 = sadd.s32 %s182, 1
      %p186 = scmp.eq.s32.totalorder %s33, 1
      %p187 = scmp.ne.s32.totalorder %s182, %s184
      %p188 = scmp.eq.s32.totalorder %s33, 0
      %p189 = por %p187, %p188
      %p190 = scmp.ne.s32.totalorder %s182, %s184
      %p191 = scmp.eq.s32.totalorder %s38, 1
      %p192 = por %p190, %p191
      %p193 = scmp.ne.s32.totalorder %s184, %s185
      %p194 = scmp.eq.s32.totalorder %s38, 0
      %p195 = por %p193, %p194
      %p196 = scmp.ne.s32.totalorder %s184, %s185
      %p197 = scmp.eq.s32.totalorder %s39, 1
      %p198 = por %p196, %p197
      %p200 = scmp.ne.s32.totalorder %s185, %s199
      %p201 = scmp.eq.s32.totalorder %s39, 0
      %p202 = por %p200, %p201
      %s204 = sadd.s32 %s203, 1
      %p207 = scmp.eq.s32.totalorder %s33, 1
      %p208 = scmp.ne.s32.totalorder %s203, %s205
      %p209 = scmp.eq.s32.totalorder %s33, 0
      %p210 = por %p208, %p209
      %p211 = scmp.ne.s32.totalorder %s203, %s205
      %p212 = scmp.eq.s32.totalorder %s38, 1
      %p213 = por %p211, %p212
      %p214 = scmp.ne.s32.totalorder %s205, %s206
      %p215 = scmp.eq.s32.totalorder %s38, 0
      %p216 = por %p214, %p215
      %p217 = scmp.ne.s32.totalorder %s205, %s206
      %p218 = scmp.eq.s32.totalorder %s39, 1
      %p219 = por %p217, %p218
      %p221 = scmp.ne.s32.totalorder %s206, %s220
      %p222 = scmp.eq.s32.totalorder %s39, 0
      %p223 = por %p221, %p222
      %s225 = sadd.s32 %s224, 1
      %p228 = scmp.eq.s32.totalorder %s33, 1
      %p229 = scmp.ne.s32.totalorder %s224, %s226
      %p230 = scmp.eq.s32.totalorder %s33, 0
      %p231 = por %p229, %p230
      %p232 = scmp.ne.s32.totalorder %s224, %s226
      %p233 = scmp.eq.s32.totalorder %s38, 1
      %p234 = por %p232, %p233
      %p235 = scmp.ne.s32.totalorder %s226, %s227
      %p236 = scmp.eq.s32.totalorder %s38, 0
      %p237 = por %p235, %p236
      %p238 = scmp.ne.s32.totalorder %s226, %s227
      %p239 = scmp.eq.s32.totalorder %s39, 1
      %p240 = por %p238, %p239
      %p242 = scmp.ne.s32.totalorder %s227, %s241
      %p243 = scmp.eq.s32.totalorder %s39, 0
      %p244 = por %p242, %p243
      %s245 = ssub.s32 %s33, %s40
      %p246 = scmp.eq.s32.totalorder %s245, 0
      %s248 = sadd.s32 %s247, 1
      %s249 = scalar_select %p246, %s247, %s248
      %p252 = pneg %p246
      %p253 = scmp.eq.s32.totalorder %s33, 1
      %p254 = por %p252, %p253
      %p255 = scmp.ne.s32.totalorder %s247, %s250
      %p256 = scmp.eq.s32.totalorder %s33, 0
      %p257 = por %p255, %p256
      %p258 = scmp.ne.s32.totalorder %s247, %s250
      %p259 = scmp.eq.s32.totalorder %s38, 1
      %p260 = por %p258, %p259
      %p261 = scmp.ne.s32.totalorder %s250, %s251
      %p262 = scmp.eq.s32.totalorder %s38, 0
      %p263 = por %p261, %p262
      %p264 = scmp.ne.s32.totalorder %s250, %s251
      %p265 = scmp.eq.s32.totalorder %s39, 1
      %p266 = por %p264, %p265
      %p268 = scmp.ne.s32.totalorder %s251, %s267
      %p269 = scmp.eq.s32.totalorder %s39, 0
      %p270 = por %p268, %p269
      %s271 = ssub.s32 %s33, %s40
      %p272 = scmp.eq.s32.totalorder %s271, 0
      %s274 = sadd.s32 %s273, 1
      %s275 = scalar_select %p272, %s273, %s274
      %p278 = pneg %p272
      %p279 = scmp.eq.s32.totalorder %s33, 1
      %p280 = por %p278, %p279
      %p281 = scmp.ne.s32.totalorder %s273, %s276
      %p282 = scmp.eq.s32.totalorder %s33, 0
      %p283 = por %p281, %p282
      %p284 = scmp.ne.s32.totalorder %s273, %s276
      %p285 = scmp.eq.s32.totalorder %s38, 1
      %p286 = por %p284, %p285
      %p287 = scmp.ne.s32.totalorder %s276, %s277
      %p288 = scmp.eq.s32.totalorder %s38, 0
      %p289 = por %p287, %p288
      %p290 = scmp.ne.s32.totalorder %s276, %s277
      %p291 = scmp.eq.s32.totalorder %s39, 1
      %p292 = por %p290, %p291
      %p294 = scmp.ne.s32.totalorder %s277, %s293
      %p295 = scmp.eq.s32.totalorder %s39, 0
      %p296 = por %p294, %p295
      %s297 = ssub.s32 %s33, %s40
      %p298 = scmp.eq.s32.totalorder %s297, 0
      %s300 = sadd.s32 %s299, 1
      %s301 = scalar_select %p298, %s299, %s300
      %p304 = pneg %p298
      %p305 = scmp.eq.s32.totalorder %s33, 1
      %p306 = por %p304, %p305
      %p307 = scmp.ne.s32.totalorder %s299, %s302
      %p308 = scmp.eq.s32.totalorder %s33, 0
      %p309 = por %p307, %p308
      %p310 = scmp.ne.s32.totalorder %s299, %s302
      %p311 = scmp.eq.s32.totalorder %s38, 1
      %p312 = por %p310, %p311
      %p313 = scmp.ne.s32.totalorder %s302, %s303
      %p314 = scmp.eq.s32.totalorder %s38, 0
      %p315 = por %p313, %p314
      %p316 = scmp.ne.s32.totalorder %s302, %s303
      %p317 = scmp.eq.s32.totalorder %s39, 1
      %p318 = por %p316, %p317
      %p320 = scmp.ne.s32.totalorder %s303, %s319
      %p321 = scmp.eq.s32.totalorder %s39, 0
      %p322 = por %p320, %p321
      %p323 = scmp.le.s32.totalorder 1, %s33
      %p324 = scmp.lt.s32.totalorder %s33, 3
      %p325 = pnand %p323, %p324
      %p326 = pneg %p325
      // Predicated region
      $region9: #{tpu_custom_call.1} parent=5 // pred_check
        _
      $region10: #{tpu_custom_call.1} parent=5 // pred_check_branch
        %328 = sbr.rel (%p325) target = $region12
      $region11: #{tpu_custom_call.1} parent=5 // pred_region
        %s329 = ssub.s32 %s33, 1
        // Predicated region
        $region13: #{tpu_custom_call.1} parent=11 // pred_check
          %p330 = pneg %p132
        $region14: #{tpu_custom_call.1} parent=11 // pred_check_branch
          %332 = sbr.rel (%p330) target = $region16
        $region15: #{tpu_custom_call.1} parent=11 // pred_region
          %s334 = ssub.s32 512, 512
          %335 = vsyncadd [#allocation9], %s334
          %s336 = sshll.u32 [#allocation8], 4
          %s337 = int_to_ptr.vmem [resolvable:$true] %s336
          %342 = dma.hbm_to_vmem [thread:$0]  %s3, 512, %s337, [#allocation9], 128, 128, 8
        $region16: #{tpu_custom_call.1} parent=11 // pred_fallthru
          _
        // Predicated region
        $region17: #{tpu_custom_call.1} parent=11 // pred_check
          %p343 = pneg %p153
        $region18: #{tpu_custom_call.1} parent=11 // pred_check_branch
          %345 = sbr.rel (%p343) target = $region20
        $region19: #{tpu_custom_call.1} parent=11 // pred_region
          %s347 = ssub.s32 16, 16
          %348 = vsyncadd [#allocation9], %s347
          %s350 = sshll.u32 [#allocation10], 4
          %s351 = int_to_ptr.vmem [resolvable:$true] %s350
          %353 = dma.hbm_to_vmem [thread:$0]  %s4, 16, %s351, [#allocation9]
        $region20: #{tpu_custom_call.1} parent=11 // pred_fallthru
          _
        // Predicated region
        $region21: #{tpu_custom_call.1} parent=11 // pred_check
          %p354 = pneg %p174
        $region22: #{tpu_custom_call.1} parent=11 // pred_check_branch
          %356 = sbr.rel (%p354) target = $region24
        $region23: #{tpu_custom_call.1} parent=11 // pred_region
          %s358 = ssub.s32 512, 512
          %359 = vsyncadd [#allocation12], %s358
          %s360 = sshll.u32 [#allocation11], 4
          %s361 = int_to_ptr.vmem [resolvable:$true] %s360
          %366 = dma.hbm_to_vmem [thread:$0]  %s5, 512, %s361, [#allocation12], 128, 128, 8
        $region24: #{tpu_custom_call.1} parent=11 // pred_fallthru
          _
        // Predicated region
        $region25: #{tpu_custom_call.1} parent=11 // pred_check
          %p367 = pneg %p195
        $region26: #{tpu_custom_call.1} parent=11 // pred_check_branch
          %369 = sbr.rel (%p367) target = $region28
        $region27: #{tpu_custom_call.1} parent=11 // pred_region
          %s371 = ssub.s32 512, 512
          %372 = vsyncadd [#allocation12], %s371
          %s373 = sshll.u32 [#allocation13], 4
          %s374 = int_to_ptr.vmem [resolvable:$true] %s373
          %379 = dma.hbm_to_vmem [thread:$0]  %s6, 512, %s374, [#allocation12], 128, 128, 8
        $region28: #{tpu_custom_call.1} parent=11 // pred_fallthru
          _
        // Predicated region
        $region29: #{tpu_custom_call.1} parent=11 // pred_check
          %p380 = pneg %p216
        $region30: #{tpu_custom_call.1} parent=11 // pred_check_branch
          %382 = sbr.rel (%p380) target = $region32
        $region31: #{tpu_custom_call.1} parent=11 // pred_region
          %s384 = ssub.s32 512, 512
          %385 = vsyncadd [#allocation15], %s384
          %s386 = sshll.u32 [#allocation14], 4
          %s387 = int_to_ptr.vmem [resolvable:$true] %s386
          %392 = dma.hbm_to_vmem [thread:$0]  %s7, 512, %s387, [#allocation15], 128, 128, 8
        $region32: #{tpu_custom_call.1} parent=11 // pred_fallthru
          _
        // Predicated region
        $region33: #{tpu_custom_call.1} parent=11 // pred_check
          %p393 = pneg %p237
        $region34: #{tpu_custom_call.1} parent=11 // pred_check_branch
          %395 = sbr.rel (%p393) target = $region36
        $region35: #{tpu_custom_call.1} parent=11 // pred_region
          %s397 = ssub.s32 16, 16
          %398 = vsyncadd [#allocation15], %s397
          %s400 = sshll.u32 [#allocation16], 4
          %s401 = int_to_ptr.vmem [resolvable:$true] %s400
          %403 = dma.hbm_to_vmem [thread:$0]  %s8, 16, %s401, [#allocation15]
        $region36: #{tpu_custom_call.1} parent=11 // pred_fallthru
          _
      $region12: #{tpu_custom_call.1} parent=5 // pred_fallthru
        _
      %p404 = scmp.lt.s32.totalorder %s33, 2
      // Predicated region
      $region37: #{tpu_custom_call.1} parent=5 // pred_check
        %p405 = pneg %p404
      $region38: #{tpu_custom_call.1} parent=5 // pred_check_branch
        %407 = sbr.rel (%p405) target = $region40
      $region39: #{tpu_custom_call.1} parent=5 // pred_region
        // Predicated region
        $region41: #{tpu_custom_call.1} parent=39 // pred_check
          %p408 = pneg %p53
        $region42: #{tpu_custom_call.1} parent=39 // pred_check_branch
          %410 = sbr.rel (%p408) target = $region44
        $region43: #{tpu_custom_call.1} parent=39 // pred_region
          %s411 = sand.u32 %s43, 1
          %s412 = scalar_lea.sflag [#allocation3], %s411
          %s413 = sand.u32 %s43, 1
          %s414 = smul.addr %s413, 8
          %s415 = scalar_lea.vmem [#allocation2], %s414
          %s417 = ssub.s32 128, 128
          %418 = vsyncadd %s412, %s417
          %s419 = smul.addr %s33, 128
          %s420 = scalar_lea.hbm %s0, %s419
          %s422 = sshll.u32 %s415, 4
          %s423 = int_to_ptr.vmem [resolvable:$true] %s422
          %425 = dma.hbm_to_vmem [thread:$0]  %s420, 128, %s423, %s412
        $region44: #{tpu_custom_call.1} parent=39 // pred_fallthru
          _
        // Predicated region
        $region45: #{tpu_custom_call.1} parent=39 // pred_check
          %p426 = pneg %p79
        $region46: #{tpu_custom_call.1} parent=39 // pred_check_branch
          %428 = sbr.rel (%p426) target = $region48
        $region47: #{tpu_custom_call.1} parent=39 // pred_region
          %s429 = sand.u32 %s33, 1
          %s430 = scalar_lea.sflag [#allocation6], %s429
          %s431 = sand.u32 %s69, 1
          %s432 = smul.addr %s431, 32
          %s433 = scalar_lea.vmem [#allocation5], %s432
          %s435 = ssub.s32 512, 512
          %436 = vsyncadd %s430, %s435
          %s437 = smul.addr %s33, 4
          %s438 = smul.addr %s437, 128
          %s439 = scalar_lea.hbm %s1, %s438
          %s440 = sshll.u32 %s433, 4
          %s441 = int_to_ptr.vmem [resolvable:$true] %s440
          %446 = dma.hbm_to_vmem [thread:$0]  %s439, 512, %s441, %s430, 128, 128, 8
        $region48: #{tpu_custom_call.1} parent=39 // pred_fallthru
          _
        // Predicated region
        $region49: #{tpu_custom_call.1} parent=39 // pred_check
          %p447 = pneg %p105
        $region50: #{tpu_custom_call.1} parent=39 // pred_check_branch
          %449 = sbr.rel (%p447) target = $region52
        $region51: #{tpu_custom_call.1} parent=39 // pred_region
          %s450 = sand.u32 %s33, 1
          %s451 = scalar_lea.sflag [#allocation6], %s450
          %s452 = sand.u32 %s95, 1
          %s453 = smul.addr %s452, 8
          %s454 = scalar_lea.vmem [#allocation7], %s453
          %s456 = ssub.s32 128, 128
          %457 = vsyncadd %s451, %s456
          %s458 = smul.addr %s33, 128
          %s459 = scalar_lea.hbm %s2, %s458
          %s461 = sshll.u32 %s454, 4
          %s462 = int_to_ptr.vmem [resolvable:$true] %s461
          %464 = dma.hbm_to_vmem [thread:$0]  %s459, 128, %s462, %s451
        $region52: #{tpu_custom_call.1} parent=39 // pred_fallthru
          _
      $region40: #{tpu_custom_call.1} parent=5 // pred_fallthru
        _
      %p465 = scmp.le.s32.totalorder 1, %s33
      %p466 = scmp.lt.s32.totalorder %s33, 3
      %p467 = pnand %p465, %p466
      %p468 = pneg %p467
      // Predicated region
      $region53: #{tpu_custom_call.1} parent=5 // pred_check
        _
      $region54: #{tpu_custom_call.1} parent=5 // pred_check_branch
        %470 = sbr.rel (%p467) target = $region56
      $region55: #{tpu_custom_call.1} parent=5 // pred_region
        %s471 = ssub.s32 %s33, 1
        %s472 = sand.u32 %s46, 1
        %s473 = scalar_lea.sflag [#allocation3], %s472
        %s474 = sand.u32 %s46, 1
        %s475 = smul.addr %s474, 8
        %s476 = scalar_lea.vmem [#allocation2], %s475
        // Predicated region
        $region57: #{tpu_custom_call.1} parent=55 // pred_check
          %p477 = pneg %p59
        $region58: #{tpu_custom_call.1} parent=55 // pred_check_branch
          %479 = sbr.rel (%p477) target = $region60
        $region59: #{tpu_custom_call.1} parent=55 // pred_region
          %480 = dma.done %s473, 128
        $region60: #{tpu_custom_call.1} parent=55 // pred_fallthru
          _
        %s481 = sand.u32 %s38, 1
        %s482 = scalar_lea.sflag [#allocation6], %s481
        %s483 = sand.u32 %s72, 1
        %s484 = smul.addr %s483, 32
        %s485 = scalar_lea.vmem [#allocation5], %s484
        // Predicated region
        $region61: #{tpu_custom_call.1} parent=55 // pred_check
          %p486 = pneg %p85
        $region62: #{tpu_custom_call.1} parent=55 // pred_check_branch
          %488 = sbr.rel (%p486) target = $region64
        $region63: #{tpu_custom_call.1} parent=55 // pred_region
          %489 = dma.done %s482, 512
        $region64: #{tpu_custom_call.1} parent=55 // pred_fallthru
          _
        %s490 = sand.u32 %s38, 1
        %s491 = scalar_lea.sflag [#allocation6], %s490
        %s492 = sand.u32 %s98, 1
        %s493 = smul.addr %s492, 8
        %s494 = scalar_lea.vmem [#allocation7], %s493
        // Predicated region
        $region65: #{tpu_custom_call.1} parent=55 // pred_check
          %p495 = pneg %p111
        $region66: #{tpu_custom_call.1} parent=55 // pred_check_branch
          %497 = sbr.rel (%p495) target = $region68
        $region67: #{tpu_custom_call.1} parent=55 // pred_region
          %498 = dma.done %s491, 128
        $region68: #{tpu_custom_call.1} parent=55 // pred_fallthru
          _
        // Predicated region
        $region69: #{tpu_custom_call.1} parent=55 // pred_check
          %p499 = pneg %p132
        $region70: #{tpu_custom_call.1} parent=55 // pred_check_branch
          %501 = sbr.rel (%p499) target = $region72
        $region71: #{tpu_custom_call.1} parent=55 // pred_region
          %502 = dma.done [#allocation9], 512
        $region72: #{tpu_custom_call.1} parent=55 // pred_fallthru
          _
        // Predicated region
        $region73: #{tpu_custom_call.1} parent=55 // pred_check
          %p503 = pneg %p153
        $region74: #{tpu_custom_call.1} parent=55 // pred_check_branch
          %505 = sbr.rel (%p503) target = $region76
        $region75: #{tpu_custom_call.1} parent=55 // pred_region
          %506 = dma.done [#allocation9], 16
        $region76: #{tpu_custom_call.1} parent=55 // pred_fallthru
          _
        // Predicated region
        $region77: #{tpu_custom_call.1} parent=55 // pred_check
          %p507 = pneg %p174
        $region78: #{tpu_custom_call.1} parent=55 // pred_check_branch
          %509 = sbr.rel (%p507) target = $region80
        $region79: #{tpu_custom_call.1} parent=55 // pred_region
          %510 = dma.done [#allocation12], 512
        $region80: #{tpu_custom_call.1} parent=55 // pred_fallthru
          _
        // Predicated region
        $region81: #{tpu_custom_call.1} parent=55 // pred_check
          %p511 = pneg %p195
        $region82: #{tpu_custom_call.1} parent=55 // pred_check_branch
          %513 = sbr.rel (%p511) target = $region84
        $region83: #{tpu_custom_call.1} parent=55 // pred_region
          %514 = dma.done [#allocation12], 512
        $region84: #{tpu_custom_call.1} parent=55 // pred_fallthru
          _
        // Predicated region
        $region85: #{tpu_custom_call.1} parent=55 // pred_check
          %p515 = pneg %p216
        $region86: #{tpu_custom_call.1} parent=55 // pred_check_branch
          %517 = sbr.rel (%p515) target = $region88
        $region87: #{tpu_custom_call.1} parent=55 // pred_region
          %518 = dma.done [#allocation15], 512
        $region88: #{tpu_custom_call.1} parent=55 // pred_fallthru
          _
        // Predicated region
        $region89: #{tpu_custom_call.1} parent=55 // pred_check
          %p519 = pneg %p237
        $region90: #{tpu_custom_call.1} parent=55 // pred_check_branch
          %521 = sbr.rel (%p519) target = $region92
        $region91: #{tpu_custom_call.1} parent=55 // pred_region
          %522 = dma.done [#allocation15], 16
        $region92: #{tpu_custom_call.1} parent=55 // pred_fallthru
          _
        %s523 = sand.u32 %s46, 1
        %s524 = scalar_lea.sflag [#allocation3], %s523
        %s525 = sand.u32 %s46, 1
        %s526 = smul.addr %s525, 8
        %s527 = scalar_lea.vmem [#allocation2], %s526
        %p528 = pneg %p59
        %p529 = pneg %p56
        %s530 = sand.u32 %s38, 1
        %s531 = scalar_lea.sflag [#allocation6], %s530
        %s532 = sand.u32 %s72, 1
        %s533 = smul.addr %s532, 32
        %s534 = scalar_lea.vmem [#allocation5], %s533
        %p535 = pneg %p85
        %p536 = pneg %p82
        %s537 = sand.u32 %s38, 1
        %s538 = scalar_lea.sflag [#allocation6], %s537
        %s539 = sand.u32 %s98, 1
        %s540 = smul.addr %s539, 8
        %s541 = scalar_lea.vmem [#allocation7], %s540
        %p542 = pneg %p111
        %p543 = pneg %p108
        %p544 = pneg %p132
        %p545 = pneg %p129
        %p546 = pneg %p153
        %p547 = pneg %p150
        %p548 = pneg %p174
        %p549 = pneg %p171
        %p550 = pneg %p195
        %p551 = pneg %p192
        %p552 = pneg %p216
        %p553 = pneg %p213
        %p554 = pneg %p237
        %p555 = pneg %p234
        %p556 = pneg %p263
        %p557 = pneg %p260
        %s558 = sand.u32 %s250, 1
        %s559 = scalar_lea.sflag [#allocation4], %s558
        %s560 = sand.u32 %s250, 1
        %s561 = smul.addr %s560, 32
        %s562 = scalar_lea.vmem [#allocation17], %s561
        %p563 = pneg %p289
        %p564 = pneg %p286
        %s565 = sand.u32 %s38, 1
        %s566 = scalar_lea.sflag [#allocation19], %s565
        %s567 = sand.u32 %s276, 1
        %s568 = smul.addr %s567, 32
        %s569 = scalar_lea.vmem [#allocation18], %s568
        %p570 = pneg %p315
        %p571 = pneg %p312
        %s572 = sand.u32 %s38, 1
        %s573 = scalar_lea.sflag [#allocation19], %s572
        %s574 = sand.u32 %s302, 1
        %s575 = smul.addr %s574, 32
        %s576 = scalar_lea.vmem [#allocation20], %s575
        %v577 = vld [vmem:[%s476] sm:$0xff]
        %v578 = vld [vmem:[%s485] sm:$0xff]
        %v579 = vld [vmem:[%s485 + $0x8] sm:$0xff]
        %v580 = vld [vmem:[%s485 + $0x10] sm:$0xff]
        %v581 = vld [vmem:[%s485 + $0x18] sm:$0xff]
        %v582 = vld [vmem:[%s494] sm:$0xff]
        %v583 = vld [vmem:[#allocation8] sm:$0xff]
        %v584 = vld [vmem:[#allocation8 + $0x8] sm:$0xff]
        %v585 = vld [vmem:[#allocation8 + $0x10] sm:$0xff]
        %v586 = vld [vmem:[#allocation8 + $0x18] sm:$0xff]
        %v587 = vld [vmem:[#allocation10] sm:$0x1]
        %v589 = vlaneseq
        %v590 = vshrl.u32 %v589, 7
        %v591 = vsub.s32 0, %v590
        %v592 = vrot.slane %v587, %v591
        %vm594 = vcmask 261120
        %v596 = vsel %vm594, %v577, 0
        %598 = vmatprep.subr.mxu0 0.0
        %599 = vmatpush1.msra.mxu0 %v583
        %600 = vmatprep.subr.mxu0 0.0
        %601 = vmatpush1.msra.mxu0 %v584
        %602 = vmatprep.subr.mxu0 0.0
        %603 = vmatpush1.msra.mxu0 %v585
        %604 = vmatprep.subr.mxu0 0.0
        %605 = vmatpush1.msra.mxu0 %v586
        %606 = vmatprep.subr.mxu0 0.0
        %607 = vmatpush1.msra.mxu0 0.0
        %608 = vmatprep.subr.mxu0 0.0
        %609 = vmatpush1.msra.mxu0 0.0
        %610 = vmatprep.subr.mxu0 0.0
        %611 = vmatpush1.msra.mxu0 0.0
        %612 = vmatprep.subr.mxu0 0.0
        %613 = vmatpush1.msra.mxu0 0.0
        %614 = vmatprep.subr.mxu0 0.0
        %615 = vmatpush1.msra.mxu0 0.0
        %616 = vmatprep.subr.mxu0 0.0
        %617 = vmatpush1.msra.mxu0 0.0
        %618 = vmatprep.subr.mxu0 0.0
        %619 = vmatpush1.msra.mxu0 0.0
        %620 = vmatprep.subr.mxu0 0.0
        %621 = vmatpush1.msra.mxu0 0.0
        %622 = vmatprep.subr.mxu0 0.0
        %623 = vmatpush1.msra.mxu0 0.0
        %624 = vmatprep.subr.mxu0 0.0
        %625 = vmatpush1.msra.mxu0 0.0
        %626 = vmatprep.subr.mxu0 0.0
        %627 = vmatpush1.msra.mxu0 0.0
        %628 = vmatprep.subr.mxu0 0.0
        %629 = vmatpush1.msra.mxu0 0.0
        %630 = vmatprep.subr.mxu0 0.0
        %631 = vmatpush1.msra.mxu0 0.0
        %632 = vmatprep.subr.mxu0 0.0
        %633 = vmatpush1.msra.mxu0 0.0
        %634 = vmatprep.subr.mxu0 0.0
        %635 = vmatpush1.msra.mxu0 0.0
        %636 = vmatprep.subr.mxu0 0.0
        %637 = vmatpush1.msra.mxu0 0.0
        %638 = vmatprep.subr.mxu0 0.0
        %639 = vmatpush1.msra.mxu0 0.0
        %640 = vmatprep.subr.mxu0 0.0
        %641 = vmatpush1.msra.mxu0 0.0
        %642 = vmatprep.subr.mxu0 0.0
        %643 = vmatpush1.msra.mxu0 0.0
        %644 = vmatprep.subr.mxu0 0.0
        %645 = vmatpush1.msra.mxu0 0.0
        %646 = vmatprep.subr.mxu0 0.0
        %647 = vmatpush1.msra.mxu0 0.0
        %648 = vmatprep.subr.mxu0 0.0
        %649 = vmatpush1.msra.mxu0 0.0
        %650 = vmatprep.subr.mxu0 0.0
        %651 = vmatpush1.msra.mxu0 0.0
        %652 = vmatprep.subr.mxu0 0.0
        %653 = vmatpush1.msra.mxu0 0.0
        %654 = vmatprep.subr.mxu0 0.0
        %655 = vmatpush1.msra.mxu0 0.0
        %656 = vmatprep.subr.mxu0 0.0
        %657 = vmatpush1.msra.mxu0 0.0
        %658 = vmatprep.subr.mxu0 0.0
        %659 = vmatpush1.msra.mxu0 0.0
        %660 = vmatprep.subr.mxu0 0.0
        %661 = vmatpush1.msra.mxu0 0.0
        %662 = vmatprep.mubr.f32.mxu0 0.0
        %663 = vmatmul.mubr.f32.gmra.mrb[0].mxu0 %v596
        %v664 = vpop.f32.mrb[0].mxu0
        %v665 = vadd.f32 %v592, %v664
        %v666 = vpop.f32.mrb[0].mxu0
        %667 = vdwg.mxu0
        %v668 = vmul.f32 %v665, 0.35355338
        %v669 = vld [vmem:[#allocation11] sm:$0xff]
        %v670 = vld [vmem:[#allocation11 + $0x8] sm:$0xff]
        %v671 = vld [vmem:[#allocation11 + $0x10] sm:$0xff]
        %v672 = vld [vmem:[#allocation11 + $0x18] sm:$0xff]
        %v673 = vld [vmem:[#allocation13] sm:$0xff]
        %v674 = vld [vmem:[#allocation13 + $0x8] sm:$0xff]
        %v675 = vld [vmem:[#allocation13 + $0x10] sm:$0xff]
        %v676 = vld [vmem:[#allocation13 + $0x18] sm:$0xff]
        %678 = vset.pattern.permute.xlu0 0
        %679 = vperm.xlu0 %678, %v673
        %v680 = vpop.permute.xlu0 %679
        %683 = vset.pattern.permute.xlu0 0
        %684 = vperm.xlu0 %683, %v674
        %v685 = vpop.permute.xlu0 %684
        %688 = vset.pattern.permute.xlu0 0
        %689 = vperm.xlu0 %688, %v675
        %v690 = vpop.permute.xlu0 %689
        %693 = vset.pattern.permute.xlu0 0
        %694 = vperm.xlu0 %693, %v676
        %v695 = vpop.permute.xlu0 %694
        %v698 = vsel %vm594, %v669, 0
        %v701 = vsel %vm594, %v670, 0
        %v704 = vsel %vm594, %v671, 0
        %v707 = vsel %vm594, %v672, 0
        %709 = vmatprep.subr.mxu0 0.0
        %710 = vmatpush1.msra.mxu0 %v578
        %711 = vmatprep.subr.mxu0 0.0
        %712 = vmatpush1.msra.mxu0 %v579
        %713 = vmatprep.subr.mxu0 0.0
        %714 = vmatpush1.msra.mxu0 %v580
        %715 = vmatprep.subr.mxu0 0.0
        %716 = vmatpush1.msra.mxu0 %v581
        %717 = vmatprep.subr.mxu0 0.0
        %718 = vmatpush1.msra.mxu0 0.0
        %719 = vmatprep.subr.mxu0 0.0
        %720 = vmatpush1.msra.mxu0 0.0
        %721 = vmatprep.subr.mxu0 0.0
        %722 = vmatpush1.msra.mxu0 0.0
        %723 = vmatprep.subr.mxu0 0.0
        %724 = vmatpush1.msra.mxu0 0.0
        %725 = vmatprep.subr.mxu0 0.0
        %726 = vmatpush1.msra.mxu0 0.0
        %727 = vmatprep.subr.mxu0 0.0
        %728 = vmatpush1.msra.mxu0 0.0
        %729 = vmatprep.subr.mxu0 0.0
        %730 = vmatpush1.msra.mxu0 0.0
        %731 = vmatprep.subr.mxu0 0.0
        %732 = vmatpush1.msra.mxu0 0.0
        %733 = vmatprep.subr.mxu0 0.0
        %734 = vmatpush1.msra.mxu0 0.0
        %735 = vmatprep.subr.mxu0 0.0
        %736 = vmatpush1.msra.mxu0 0.0
        %737 = vmatprep.subr.mxu0 0.0
        %738 = vmatpush1.msra.mxu0 0.0
        %739 = vmatprep.subr.mxu0 0.0
        %740 = vmatpush1.msra.mxu0 0.0
        %741 = vmatprep.subr.mxu0 0.0
        %742 = vmatpush1.msra.mxu0 0.0
        %743 = vmatprep.subr.mxu0 0.0
        %744 = vmatpush1.msra.mxu0 0.0
        %745 = vmatprep.subr.mxu0 0.0
        %746 = vmatpush1.msra.mxu0 0.0
        %747 = vmatprep.subr.mxu0 0.0
        %748 = vmatpush1.msra.mxu0 0.0
        %749 = vmatprep.subr.mxu0 0.0
        %750 = vmatpush1.msra.mxu0 0.0
        %751 = vmatprep.subr.mxu0 0.0
        %752 = vmatpush1.msra.mxu0 0.0
        %753 = vmatprep.subr.mxu0 0.0
        %754 = vmatpush1.msra.mxu0 0.0
        %755 = vmatprep.subr.mxu0 0.0
        %756 = vmatpush1.msra.mxu0 0.0
        %757 = vmatprep.subr.mxu0 0.0
        %758 = vmatpush1.msra.mxu0 0.0
        %759 = vmatprep.subr.mxu0 0.0
        %760 = vmatpush1.msra.mxu0 0.0
        %761 = vmatprep.subr.mxu0 0.0
        %762 = vmatpush1.msra.mxu0 0.0
        %763 = vmatprep.subr.mxu0 0.0
        %764 = vmatpush1.msra.mxu0 0.0
        %765 = vmatprep.subr.mxu0 0.0
        %766 = vmatpush1.msra.mxu0 0.0
        %767 = vmatprep.subr.mxu0 0.0
        %768 = vmatpush1.msra.mxu0 0.0
        %769 = vmatprep.subr.mxu0 0.0
        %770 = vmatpush1.msra.mxu0 0.0
        %771 = vmatprep.subr.mxu0 0.0
        %772 = vmatpush1.msra.mxu0 0.0
        %773 = vmatprep.mubr.f32.mxu0 0.0
        %774 = vmatmul.mubr.f32.gmra.mrb[0].mxu0 %v698
        %v775 = vpop.f32.mrb[0].mxu0
        %v776 = vadd.f32 %v680, %v775
        %v777 = vpop.f32.mrb[0].mxu0
        %778 = vmatprep.mubr.f32.mxu0 0.0
        %779 = vmatmul.mubr.f32.gmra.mrb[0].mxu0 %v701
        %v780 = vpop.f32.mrb[0].mxu0
        %v781 = vadd.f32 %v685, %v780
        %v782 = vpop.f32.mrb[0].mxu0
        %783 = vmatprep.mubr.f32.mxu0 0.0
        %784 = vmatmul.mubr.f32.gmra.mrb[0].mxu0 %v704
        %v785 = vpop.f32.mrb[0].mxu0
        %v786 = vadd.f32 %v690, %v785
        %v787 = vpop.f32.mrb[0].mxu0
        %788 = vmatprep.mubr.f32.mxu0 0.0
        %789 = vmatmul.mubr.f32.gmra.mrb[0].mxu0 %v707
        %v790 = vpop.f32.mrb[0].mxu0
        %v791 = vadd.f32 %v695, %v790
        %v792 = vpop.f32.mrb[0].mxu0
        %793 = vdwg.mxu0
        %v794 = vld [vmem:[#allocation14] sm:$0xff]
        %v795 = vld [vmem:[#allocation14 + $0x8] sm:$0xff]
        %v796 = vld [vmem:[#allocation14 + $0x10] sm:$0xff]
        %v797 = vld [vmem:[#allocation14 + $0x18] sm:$0xff]
        %v798 = vld [vmem:[#allocation16] sm:$0x1]
        %v800 = vlaneseq
        %v801 = vshrl.u32 %v800, 7
        %v802 = vsub.s32 0, %v801
        %v803 = vrot.slane %v798, %v802
        %v806 = vsel %vm594, %v582, 0
        %808 = vmatprep.subr.mxu0 0.0
        %809 = vmatpush1.msra.mxu0 %v794
        %810 = vmatprep.subr.mxu0 0.0
        %811 = vmatpush1.msra.mxu0 %v795
        %812 = vmatprep.subr.mxu0 0.0
        %813 = vmatpush1.msra.mxu0 %v796
        %814 = vmatprep.subr.mxu0 0.0
        %815 = vmatpush1.msra.mxu0 %v797
        %816 = vmatprep.subr.mxu0 0.0
        %817 = vmatpush1.msra.mxu0 0.0
        %818 = vmatprep.subr.mxu0 0.0
        %819 = vmatpush1.msra.mxu0 0.0
        %820 = vmatprep.subr.mxu0 0.0
        %821 = vmatpush1.msra.mxu0 0.0
        %822 = vmatprep.subr.mxu0 0.0
        %823 = vmatpush1.msra.mxu0 0.0
        %824 = vmatprep.subr.mxu0 0.0
        %825 = vmatpush1.msra.mxu0 0.0
        %826 = vmatprep.subr.mxu0 0.0
        %827 = vmatpush1.msra.mxu0 0.0
        %828 = vmatprep.subr.mxu0 0.0
        %829 = vmatpush1.msra.mxu0 0.0
        %830 = vmatprep.subr.mxu0 0.0
        %831 = vmatpush1.msra.mxu0 0.0
        %832 = vmatprep.subr.mxu0 0.0
        %833 = vmatpush1.msra.mxu0 0.0
        %834 = vmatprep.subr.mxu0 0.0
        %835 = vmatpush1.msra.mxu0 0.0
        %836 = vmatprep.subr.mxu0 0.0
        %837 = vmatpush1.msra.mxu0 0.0
        %838 = vmatprep.subr.mxu0 0.0
        %839 = vmatpush1.msra.mxu0 0.0
        %840 = vmatprep.subr.mxu0 0.0
        %841 = vmatpush1.msra.mxu0 0.0
        %842 = vmatprep.subr.mxu0 0.0
        %843 = vmatpush1.msra.mxu0 0.0
        %844 = vmatprep.subr.mxu0 0.0
        %845 = vmatpush1.msra.mxu0 0.0
        %846 = vmatprep.subr.mxu0 0.0
        %847 = vmatpush1.msra.mxu0 0.0
        %848 = vmatprep.subr.mxu0 0.0
        %849 = vmatpush1.msra.mxu0 0.0
        %850 = vmatprep.subr.mxu0 0.0
        %851 = vmatpush1.msra.mxu0 0.0
        %852 = vmatprep.subr.mxu0 0.0
        %853 = vmatpush1.msra.mxu0 0.0
        %854 = vmatprep.subr.mxu0 0.0
        %855 = vmatpush1.msra.mxu0 0.0
        %856 = vmatprep.subr.mxu0 0.0
        %857 = vmatpush1.msra.mxu0 0.0
        %858 = vmatprep.subr.mxu0 0.0
        %859 = vmatpush1.msra.mxu0 0.0
        %860 = vmatprep.subr.mxu0 0.0
        %861 = vmatpush1.msra.mxu0 0.0
        %862 = vmatprep.subr.mxu0 0.0
        %863 = vmatpush1.msra.mxu0 0.0
        %864 = vmatprep.subr.mxu0 0.0
        %865 = vmatpush1.msra.mxu0 0.0
        %866 = vmatprep.subr.mxu0 0.0
        %867 = vmatpush1.msra.mxu0 0.0
        %868 = vmatprep.subr.mxu0 0.0
        %869 = vmatpush1.msra.mxu0 0.0
        %870 = vmatprep.subr.mxu0 0.0
        %871 = vmatpush1.msra.mxu0 0.0
        %872 = vmatprep.mubr.f32.mxu0 0.0
        %873 = vmatmul.mubr.f32.gmra.mrb[0].mxu0 %v806
        %v874 = vpop.f32.mrb[0].mxu0
        %v875 = vadd.f32 %v803, %v874
        %v876 = vpop.f32.mrb[0].mxu0
        %877 = vdwg.mxu0
        %vm878 = vcmask 64512
        %879 = vst.msk [vmem:[%s562] sm:$0xff] %vm878, %v668
        %880 = vst.msk [vmem:[%s569] sm:$0xff] %vm878, %v776
        %881 = vst.msk [vmem:[%s576] sm:$0xff] %vm878, %v875
        %883 = vrot.lane.b32.xlu0 %v668, 120
        %v884 = vpop.permute.xlu0 %883
        %s886 = scalar_lea.vmem %s562, 8 [#allocation17]
        %887 = vst.msk [vmem:[%s886] sm:$0xff] %vm878, %v884
        %s888 = scalar_lea.vmem %s569, 8 [#allocation18]
        %889 = vst.msk [vmem:[%s888] sm:$0xff] %vm878, %v781
        %891 = vrot.lane.b32.xlu0 %v875, 120
        %v892 = vpop.permute.xlu0 %891
        %s894 = scalar_lea.vmem %s576, 8 [#allocation20]
        %895 = vst.msk [vmem:[%s894] sm:$0xff] %vm878, %v892
        %896 = vrot.lane.b32.xlu0 %v668, 112
        %v897 = vpop.permute.xlu0 %896
        %s899 = scalar_lea.vmem %s562, 16 [#allocation17]
        %900 = vst.msk [vmem:[%s899] sm:$0xff] %vm878, %v897
        %s901 = scalar_lea.vmem %s569, 16 [#allocation18]
        %902 = vst.msk [vmem:[%s901] sm:$0xff] %vm878, %v786
        %903 = vrot.lane.b32.xlu0 %v875, 112
        %v904 = vpop.permute.xlu0 %903
        %s906 = scalar_lea.vmem %s576, 16 [#allocation20]
        %907 = vst.msk [vmem:[%s906] sm:$0xff] %vm878, %v904
        %908 = vrot.lane.b32.xlu0 %v668, 104
        %v909 = vpop.permute.xlu0 %908
        %s911 = scalar_lea.vmem %s562, 24 [#allocation17]
        %912 = vst.msk [vmem:[%s911] sm:$0xff] %vm878, %v909
        %s913 = scalar_lea.vmem %s569, 24 [#allocation18]
        %914 = vst.msk [vmem:[%s913] sm:$0xff] %vm878, %v791
        %915 = vrot.lane.b32.xlu0 %v875, 104
        %v916 = vpop.permute.xlu0 %915
        %s918 = scalar_lea.vmem %s576, 24 [#allocation20]
        %919 = vst.msk [vmem:[%s918] sm:$0xff] %vm878, %v916
        %s920 = sand.u32 %s250, 1
        %s921 = scalar_lea.sflag [#allocation4], %s920
        %s922 = sand.u32 %s250, 1
        %s923 = smul.addr %s922, 32
        %s924 = scalar_lea.vmem [#allocation17], %s923
        %s925 = sand.u32 %s38, 1
        %s926 = scalar_lea.sflag [#allocation19], %s925
        %s927 = sand.u32 %s276, 1
        %s928 = smul.addr %s927, 32
        %s929 = scalar_lea.vmem [#allocation18], %s928
        %s930 = sand.u32 %s38, 1
        %s931 = scalar_lea.sflag [#allocation19], %s930
        %s932 = sand.u32 %s302, 1
        %s933 = smul.addr %s932, 32
        %s934 = scalar_lea.vmem [#allocation20], %s933
        // Predicated region
        $region93: #{tpu_custom_call.1} parent=55 // pred_check
          %p935 = pneg %p260
        $region94: #{tpu_custom_call.1} parent=55 // pred_check_branch
          %937 = sbr.rel (%p935) target = $region96
        $region95: #{tpu_custom_call.1} parent=55 // pred_region
          %s939 = ssub.s32 512, 512
          %940 = vsyncadd %s921, %s939
          %s941 = smul.addr %s38, 4
          %s942 = smul.addr %s941, 128
          %s943 = scalar_lea.hbm %s9, %s942
          %s944 = sshll.u32 %s924, 4
          %s945 = int_to_ptr.vmem [resolvable:$true] %s944
          %950 = dma.vmem_to_hbm [thread:$0]  %s945, 512, %s943, %s921, 128, 128, 8
        $region96: #{tpu_custom_call.1} parent=55 // pred_fallthru
          _
        // Predicated region
        $region97: #{tpu_custom_call.1} parent=55 // pred_check
          %p951 = pneg %p286
        $region98: #{tpu_custom_call.1} parent=55 // pred_check_branch
          %953 = sbr.rel (%p951) target = $region100
        $region99: #{tpu_custom_call.1} parent=55 // pred_region
          %s955 = ssub.s32 512, 512
          %956 = vsyncadd %s926, %s955
          %s957 = smul.addr %s38, 4
          %s958 = smul.addr %s957, 128
          %s959 = scalar_lea.hbm %s10, %s958
          %s960 = sshll.u32 %s929, 4
          %s961 = int_to_ptr.vmem [resolvable:$true] %s960
          %966 = dma.vmem_to_hbm [thread:$0]  %s961, 512, %s959, %s926, 128, 128, 8
        $region100: #{tpu_custom_call.1} parent=55 // pred_fallthru
          _
        // Predicated region
        $region101: #{tpu_custom_call.1} parent=55 // pred_check
          %p967 = pneg %p312
        $region102: #{tpu_custom_call.1} parent=55 // pred_check_branch
          %969 = sbr.rel (%p967) target = $region104
        $region103: #{tpu_custom_call.1} parent=55 // pred_region
          %s971 = ssub.s32 512, 512
          %972 = vsyncadd %s931, %s971
          %s973 = smul.addr %s38, 4
          %s974 = smul.addr %s973, 128
          %s975 = scalar_lea.hbm %s11, %s974
          %s976 = sshll.u32 %s934, 4
          %s977 = int_to_ptr.vmem [resolvable:$true] %s976
          %982 = dma.vmem_to_hbm [thread:$0]  %s977, 512, %s975, %s931, 128, 128, 8
        $region104: #{tpu_custom_call.1} parent=55 // pred_fallthru
          _
      $region56: #{tpu_custom_call.1} parent=5 // pred_fallthru
        _
      %p983 = scmp.le.s32.totalorder 2, %s33
      // Predicated region
      $region105: #{tpu_custom_call.1} parent=5 // pred_check
        %p984 = pneg %p983
      $region106: #{tpu_custom_call.1} parent=5 // pred_check_branch
        %986 = sbr.rel (%p984) target = $region108
      $region107: #{tpu_custom_call.1} parent=5 // pred_region
        %s987 = ssub.s32 %s33, 2
        // Predicated region
        $region109: #{tpu_custom_call.1} parent=107 // pred_check
          %p988 = pneg %p266
        $region110: #{tpu_custom_call.1} parent=107 // pred_check_branch
          %990 = sbr.rel (%p988) target = $region112
        $region111: #{tpu_custom_call.1} parent=107 // pred_region
          %s991 = sand.u32 %s251, 1
          %s992 = scalar_lea.sflag [#allocation4], %s991
          %s993 = sand.u32 %s251, 1
          %s994 = smul.addr %s993, 32
          %s995 = scalar_lea.vmem [#allocation17], %s994
          %996 = dma.done %s992, 512
        $region112: #{tpu_custom_call.1} parent=107 // pred_fallthru
          _
        // Predicated region
        $region113: #{tpu_custom_call.1} parent=107 // pred_check
          %p997 = pneg %p292
        $region114: #{tpu_custom_call.1} parent=107 // pred_check_branch
          %999 = sbr.rel (%p997) target = $region116
        $region115: #{tpu_custom_call.1} parent=107 // pred_region
          %s1000 = sand.u32 %s39, 1
          %s1001 = scalar_lea.sflag [#allocation19], %s1000
          %s1002 = sand.u32 %s277, 1
          %s1003 = smul.addr %s1002, 32
          %s1004 = scalar_lea.vmem [#allocation18], %s1003
          %1005 = dma.done %s1001, 512
        $region116: #{tpu_custom_call.1} parent=107 // pred_fallthru
          _
        // Predicated region
        $region117: #{tpu_custom_call.1} parent=107 // pred_check
          %p1006 = pneg %p318
        $region118: #{tpu_custom_call.1} parent=107 // pred_check_branch
          %1008 = sbr.rel (%p1006) target = $region120
        $region119: #{tpu_custom_call.1} parent=107 // pred_region
          %s1009 = sand.u32 %s39, 1
          %s1010 = scalar_lea.sflag [#allocation19], %s1009
          %s1011 = sand.u32 %s303, 1
          %s1012 = smul.addr %s1011, 32
          %s1013 = scalar_lea.vmem [#allocation20], %s1012
          %1014 = dma.done %s1010, 512
        $region120: #{tpu_custom_call.1} parent=107 // pred_fallthru
          _
      $region108: #{tpu_custom_call.1} parent=5 // pred_fallthru
        _
    $region6: #{tpu_custom_call.1} parent=1 // loop_footer
      %s37 = sadd.s32 1, %s33
    $region7: #{tpu_custom_call.1} parent=1 // loop_footer_branch
      %32 = sbr.rel target = $region3
    $region8: #{tpu_custom_call.1} parent=1 // loop_exit
      _
    %1015 = vsyncpa [#allocation3], 1
    %s1016 = scalar_lea.sflag [#allocation3], 1
    %1017 = vsyncpa %s1016, 1
    %1018 = vsyncpa [#allocation6], 1
    %s1019 = scalar_lea.sflag [#allocation6], 1
    %1020 = vsyncpa %s1019, 1
    %1021 = vsyncpa [#allocation9], 1
    %1022 = vsyncpa [#allocation12], 1
    %1023 = vsyncpa [#allocation15], 1
    %1024 = vsyncpa [#allocation4], 1
    %s1025 = scalar_lea.sflag [#allocation4], 1
    %1026 = vsyncpa %s1025, 1
    %1027 = vsyncpa [#allocation19], 1
    %s1028 = scalar_lea.sflag [#allocation19], 1
    %1029 = vsyncpa %s1028, 1

</llo_original>
